<compile_context>
chip_gen: v7x
topology: tpu7x:2x2x1
jax: 0.10.0
libtpu: 0.0.40
codegen_flags: <defaults>
</compile_context>

<pallas_src>
import functools

import jax
import jax.numpy as jnp
from jax.experimental import pallas as pl
from jax.experimental.pallas import tpu as pltpu

_EPS = 1e-12


# ---------------------------------------------------------------------------
# Generation-aware scoped-VMEM limit (v5e/v6e: 128 MiB physical, v7x: 64 MiB).
# ---------------------------------------------------------------------------
@functools.lru_cache(maxsize=None)
def _vmem_limit():
    cap = None
    try:
        cap = getattr(pltpu.get_tpu_info(), "vmem_capacity_bytes", None)
    except Exception:
        cap = None
    if cap is None:
        return 48 * 1024 * 1024                 # unknown: conservative
    if cap >= 128 * 1024 * 1024:
        return 64 * 1024 * 1024                 # v5e / v6e: plenty of headroom
    return max(32 * 1024 * 1024,                # v7x: leave compiler headroom
               min(40 * 1024 * 1024, (cap * 3) // 4))


def _params(dims):
    return pltpu.CompilerParams(dimension_semantics=dims,
                                vmem_limit_bytes=_vmem_limit())


# ---------------------------------------------------------------------------
# Tile-size helper: largest aligned tile <= target that divides the dim,
# falling back to the full dim (satisfies the "divisible or full" rule).
# ---------------------------------------------------------------------------
def _pick_tile(dim, target, align):
    if dim <= target:
        return dim
    t = (target // align) * align
    while t >= align:
        if dim % t == 0:
            return t
        t -= align
    return dim


# ---------------------------------------------------------------------------
# Kernels
# ---------------------------------------------------------------------------
def _apply_act(y, activation):
    if activation == "relu":
        return jnp.maximum(y, 0.0)
    if activation == "gelu":
        # TODO(synk): HF BERT uses exact erf GELU; tanh approx drifts slightly.
        return jax.nn.gelu(y, approximate=True)
    return y


def _linear_fullk_kernel(x_ref, w_ref, b_ref, o_ref, *, activation):
    # Single-shot matmul over the whole K: grid = (M tiles, N tiles).
    y = jnp.dot(x_ref[...], w_ref[...],
                preferred_element_type=jnp.float32) + b_ref[...]
    o_ref[...] = _apply_act(y, activation).astype(o_ref.dtype)


def _linear_kloop_kernel(x_ref, w_ref, b_ref, o_ref, acc_ref, *, activation):
    # grid = (M tiles, N tiles, K tiles); acc_ref is a VMEM f32 accumulator.
    @pl.when(pl.program_id(2) == 0)
    def _():
        acc_ref[...] = jnp.zeros_like(acc_ref)

    acc_ref[...] += jnp.dot(x_ref[...], w_ref[...],
                            preferred_element_type=jnp.float32)

    @pl.when(pl.program_id(2) == pl.num_programs(2) - 1)
    def _():
        y = acc_ref[...] + b_ref[...]
        o_ref[...] = _apply_act(y, activation).astype(o_ref.dtype)


def _layer_norm(h, g, b, eps):
    mu = jnp.mean(h, axis=-1, keepdims=True)
    var = jnp.mean((h - mu) ** 2, axis=-1, keepdims=True)
    return ((h - mu) * jax.lax.rsqrt(var + eps)) * g + b


def _linear_res_ln_fullk_kernel(x_ref, w_ref, b_ref, r_ref, g_ref, be_ref,
                                o_ref, *, eps):
    # o = LayerNorm(x @ w + b + residual); full K & full N per tile.
    h = (jnp.dot(x_ref[...], w_ref[...], preferred_element_type=jnp.float32)
         + b_ref[...] + r_ref[...].astype(jnp.float32))
    o_ref[...] = _layer_norm(h, g_ref[...], be_ref[...], eps).astype(o_ref.dtype)


def _linear_res_ln_kloop_kernel(x_ref, w_ref, b_ref, r_ref, g_ref, be_ref,
                                o_ref, acc_ref, *, eps):
    # grid = (M tiles, K tiles); full N per tile so LN reduces over whole row.
    @pl.when(pl.program_id(1) == 0)
    def _():
        acc_ref[...] = jnp.zeros_like(acc_ref)

    acc_ref[...] += jnp.dot(x_ref[...], w_ref[...],
                            preferred_element_type=jnp.float32)

    @pl.when(pl.program_id(1) == pl.num_programs(1) - 1)
    def _():
        h = acc_ref[...] + b_ref[...] + r_ref[...].astype(jnp.float32)
        o_ref[...] = _layer_norm(h, g_ref[...], be_ref[...], eps).astype(o_ref.dtype)


def _embed_ln_kernel(w_ref, p_ref, t_ref, g_ref, b_ref, o_ref, *, eps):
    # Fused word+pos+type add + LayerNorm (one batch element per grid step).
    h = w_ref[0] + p_ref[...] + t_ref[...]            # (S, D) f32
    o_ref[0] = _layer_norm(h, g_ref[...], b_ref[...], eps).astype(o_ref.dtype)


def _attn_kernel(qkv_ref, m_ref, o_ref, *, heads, scale):
    # One batch element per grid step; q/k/v read directly from the fused
    # (1, S, 3D) QKV block (no XLA head split/merge transposes).
    S = qkv_ref.shape[1]
    D = qkv_ref.shape[2] // 3
    Dh = D // heads

    qkv = qkv_ref[0]                                  # (S, 3D) bf16
    bias = (1.0 - m_ref[0].astype(jnp.float32)) * (-1e9)   # (1, S)

    outs = []
    for h in range(heads):                            # static unroll, H small
        q = qkv[:, h * Dh:(h + 1) * Dh]
        k = qkv[:, D + h * Dh:D + (h + 1) * Dh]
        v = qkv[:, 2 * D + h * Dh:2 * D + (h + 1) * Dh]
        s = jnp.einsum("qd,kd->qk", q, k,
                       preferred_element_type=jnp.float32) * scale + bias
        mx = jnp.max(s, axis=-1, keepdims=True)
        p = jnp.exp(s - mx)
        p = p * pl.reciprocal(jnp.sum(p, axis=-1, keepdims=True), approx=True)
        outs.append(jnp.dot(p.astype(jnp.bfloat16), v,
                            preferred_element_type=jnp.float32))
    # Single lane-dense (S, D) store instead of H masked Dh-wide stores.
    o_ref[0] = jnp.concatenate(outs, axis=-1).astype(o_ref.dtype)


def _clf_kernel(x_ref, w1_ref, b1_ref, w2_ref, b2_ref, o_ref):
    # Fused Linear -> ReLU -> Linear on the tiny (B, D) CLS slice.
    h = jnp.dot(x_ref[...], w1_ref[...],
                preferred_element_type=jnp.float32) + b1_ref[...]
    h = jnp.maximum(h, 0.0)
    o_ref[...] = jnp.dot(h.astype(jnp.bfloat16), w2_ref[...],
                         preferred_element_type=jnp.float32) + b2_ref[...]


# ---------------------------------------------------------------------------
# Wrappers
# ---------------------------------------------------------------------------
def linear(x, w, b, activation=None, tm=512, tn=512, tk=1024,
           out_dtype=jnp.bfloat16):
    M, K = x.shape
    N = w.shape[1]
    tm = _pick_tile(M, tm, 16)          # bf16 sublane alignment
    tn = _pick_tile(N, tn, 128)
    b2 = b.reshape(1, N).astype(jnp.float32)

    if K <= 1024:                        # full-K single-shot matmul
        return pl.pallas_call(
            functools.partial(_linear_fullk_kernel, activation=activation),
            out_shape=jax.ShapeDtypeStruct((M, N), out_dtype),
            grid=(M // tm, N // tn),
            in_specs=[pl.BlockSpec((tm, K), lambda i, j: (i, 0)),
                      pl.BlockSpec((K, tn), lambda i, j: (0, j)),
                      pl.BlockSpec((1, tn), lambda i, j: (0, j))],
            out_specs=pl.BlockSpec((tm, tn), lambda i, j: (i, j)),
            compiler_params=_params(("parallel", "parallel")),
        )(x, w, b2)

    tk = _pick_tile(K, tk, 128)
    return pl.pallas_call(
        functools.partial(_linear_kloop_kernel, activation=activation),
        out_shape=jax.ShapeDtypeStruct((M, N), out_dtype),
        grid=(M // tm, N // tn, K // tk),
        in_specs=[pl.BlockSpec((tm, tk), lambda i, j, k: (i, k)),
                  pl.BlockSpec((tk, tn), lambda i, j, k: (k, j)),
                  pl.BlockSpec((1, tn), lambda i, j, k: (0, j))],
        out_specs=pl.BlockSpec((tm, tn), lambda i, j, k: (i, j)),
        scratch_shapes=[pltpu.VMEM((tm, tn), jnp.float32)],
        compiler_params=_params(("parallel", "parallel", "arbitrary")),
    )(x, w, b2)


def linear_res_ln(x, w, b, residual, gamma, beta, eps=_EPS, tm=512, tk=1024,
                  out_dtype=jnp.bfloat16):
    M, K = x.shape
    N = w.shape[1]
    tm = _pick_tile(M, tm, 16)
    b2 = b.reshape(1, N).astype(jnp.float32)
    g2 = gamma.reshape(1, N).astype(jnp.float32)
    be2 = beta.reshape(1, N).astype(jnp.float32)

    if K <= 1024:
        return pl.pallas_call(
            functools.partial(_linear_res_ln_fullk_kernel, eps=eps),
            out_shape=jax.ShapeDtypeStruct((M, N), out_dtype),
            grid=(M // tm,),
            in_specs=[pl.BlockSpec((tm, K), lambda i: (i, 0)),
                      pl.BlockSpec((K, N), lambda i: (0, 0)),
                      pl.BlockSpec((1, N), lambda i: (0, 0)),
                      pl.BlockSpec((tm, N), lambda i: (i, 0)),
                      pl.BlockSpec((1, N), lambda i: (0, 0)),
                      pl.BlockSpec((1, N), lambda i: (0, 0))],
            out_specs=pl.BlockSpec((tm, N), lambda i: (i, 0)),
            compiler_params=_params(("parallel",)),
        )(x, w, b2, residual, g2, be2)

    tk = _pick_tile(K, tk, 128)
    return pl.pallas_call(
        functools.partial(_linear_res_ln_kloop_kernel, eps=eps),
        out_shape=jax.ShapeDtypeStruct((M, N), out_dtype),
        grid=(M // tm, K // tk),
        in_specs=[pl.BlockSpec((tm, tk), lambda i, k: (i, k)),
                  pl.BlockSpec((tk, N), lambda i, k: (k, 0)),
                  pl.BlockSpec((1, N), lambda i, k: (0, 0)),
                  pl.BlockSpec((tm, N), lambda i, k: (i, 0)),
                  pl.BlockSpec((1, N), lambda i, k: (0, 0)),
                  pl.BlockSpec((1, N), lambda i, k: (0, 0))],
        out_specs=pl.BlockSpec((tm, N), lambda i, k: (i, 0)),
        scratch_shapes=[pltpu.VMEM((tm, N), jnp.float32)],
        compiler_params=_params(("parallel", "arbitrary")),
    )(x, w, b2, residual, g2, be2)


def embed_layernorm(word_bsd, pos_sd, type_1d, gamma, beta, eps=_EPS):
    B, S, D = word_bsd.shape
    return pl.pallas_call(
        functools.partial(_embed_ln_kernel, eps=eps),
        out_shape=jax.ShapeDtypeStruct((B, S, D), jnp.bfloat16),
        grid=(B,),
        in_specs=[pl.BlockSpec((1, S, D), lambda b: (b, 0, 0)),
                  pl.BlockSpec((S, D), lambda b: (0, 0)),
                  pl.BlockSpec((1, D), lambda b: (0, 0)),
                  pl.BlockSpec((1, D), lambda b: (0, 0)),
                  pl.BlockSpec((1, D), lambda b: (0, 0))],
        out_specs=pl.BlockSpec((1, S, D), lambda b: (b, 0, 0)),
        compiler_params=_params(("parallel",)),
    )(word_bsd, pos_sd,
      type_1d.astype(jnp.float32),
      gamma.reshape(1, D).astype(jnp.float32),
      beta.reshape(1, D).astype(jnp.float32))


def attention(qkv_bsd, mask_b1s, *, heads, scale):
    B, S, threeD = qkv_bsd.shape
    D = threeD // 3
    return pl.pallas_call(
        functools.partial(_attn_kernel, heads=heads, scale=scale),
        out_shape=jax.ShapeDtypeStruct((B, S, D), jnp.bfloat16),
        grid=(B,),
        in_specs=[pl.BlockSpec((1, S, threeD), lambda b: (b, 0, 0)),
                  pl.BlockSpec((1, 1, S), lambda b: (b, 0, 0))],
        out_specs=pl.BlockSpec((1, S, D), lambda b: (b, 0, 0)),
        compiler_params=_params(("parallel",)),
    )(qkv_bsd, mask_b1s)


def classifier_head(x, w1, b1, w2, b2):
    Hc = w1.shape[1]
    C = w2.shape[1]
    # Tiny (B, D) x (D, H) x (H, 5): whole-array VMEM call, no grid needed.
    return pl.pallas_call(
        _clf_kernel,
        out_shape=jax.ShapeDtypeStruct((x.shape[0], C), jnp.float32),
        compiler_params=pltpu.CompilerParams(vmem_limit_bytes=_vmem_limit()),
    )(x, w1, b1.reshape(1, Hc).astype(jnp.float32),
      w2, b2.reshape(1, C).astype(jnp.float32))


# ---------------------------------------------------------------------------
# Mini-BERT encoder layer + classifier forward
# ---------------------------------------------------------------------------
def bert_layer(x, mask_b1s, p, B, S, D, H):
    Dh = D // H

    # Fused QKV projection: one (B*S, D) x (D, 3D) matmul, x read once.
    qkv = linear(x, p["w_qkv"], p["b_qkv"])                  # (B*S, 3D) bf16
    qkv = qkv.reshape(B, S, 3 * D)                           # free reshape

    # Attention reads q/k/v straight out of qkv, writes lane-dense (B,S,D).
    ctx = attention(qkv, mask_b1s, heads=H, scale=1.0 / (Dh ** 0.5))
    ctx = ctx.reshape(B * S, D)                              # free reshape

    # Attention output projection with fused residual-add + LayerNorm epilogue.
    x = linear_res_ln(ctx, p["wo"], p["bo"], x, p["ln1_g"], p["ln1_b"])

    # FFN: GELU matmul, then second matmul with fused residual + LayerNorm.
    ff = linear(x, p["w1"], p["b1"], activation="gelu")
    x = linear_res_ln(ff, p["w2"], p["b2"], x, p["ln2_g"], p["ln2_b"])
    return x


def bert_classifier_forward(params, input_ids, attention_mask, cfg):
    B, S = input_ids.shape
    D, H = cfg["hidden"], cfg["heads"]

    # Embedding gather is plain-JAX glue; sum + LayerNorm fused in one kernel.
    word = jnp.take(params["word_emb"], input_ids, axis=0)   # (B,S,D) f32
    pos = params["pos_emb"][:S]                              # (S,D)
    tok = params["type_emb"][0:1]                            # (1,D)
    x = embed_layernorm(word, pos, tok,
                        params["emb_ln_g"], params["emb_ln_b"])
    x = x.reshape(B * S, D)                                  # bf16

    # Attention mask stays (B, 1, S); the -1e9 bias is built inside the kernel.
    mask = attention_mask.astype(jnp.float32).reshape(B, 1, S)

    for lp in params["layers"]:
        x = bert_layer(x, mask, lp, B, S, D, H)

    # opt.sent_embedding == 0: take [CLS] (token 0) of the last hidden state.
    cls = x.reshape(B, S, D)[:, 0, :]                        # (B,D) bf16
    # nn.Dropout is identity at inference time.

    # classifier: Linear(D_in, H) -> ReLU -> Linear(H, 5), fused in one kernel.
    logits = classifier_head(cls, params["wc1"], params["bc1"],
                             params["wc2"], params["bc2"])
    return logits


# ---------------------------------------------------------------------------
# Deterministic parameter init (synthetic, NOT a checkpoint load)
# ---------------------------------------------------------------------------
def init_params(key, cfg):
    D = cfg["hidden"]
    F = cfg["ffn"]
    keys = iter(jax.random.split(key, 128))

    def w(shape, std=0.02, dtype=jnp.bfloat16):
        # Weights stored bf16 (MXU operands); accumulation stays f32 in-kernel.
        return (jax.random.normal(next(keys), shape, jnp.float32) * std).astype(dtype)

    params = {
        "word_emb": w((cfg["vocab"], D), dtype=jnp.float32),
        "pos_emb": w((cfg["max_pos"], D), dtype=jnp.float32),
        "type_emb": w((2, D), dtype=jnp.float32),
        "emb_ln_g": jnp.ones((D,), jnp.float32),
        "emb_ln_b": jnp.zeros((D,), jnp.float32),
        "layers": [],
        "wc1": w((D, cfg["clf_hidden"])),
        "bc1": jnp.zeros((cfg["clf_hidden"],), jnp.float32),
        "wc2": w((cfg["clf_hidden"], cfg["classes"])),
        "bc2": jnp.zeros((cfg["classes"],), jnp.float32),
    }
    for _ in range(cfg["layers"]):
        wq, wk, wv = w((D, D)), w((D, D)), w((D, D))
        params["layers"].append({
            "w_qkv": jnp.concatenate([wq, wk, wv], axis=1),       # (D, 3D) bf16
            "b_qkv": jnp.zeros((3 * D,), jnp.float32),
            "wo": w((D, D)), "bo": jnp.zeros((D,), jnp.float32),
            "ln1_g": jnp.ones((D,), jnp.float32),
            "ln1_b": jnp.zeros((D,), jnp.float32),
            "w1": w((D, F)), "b1": jnp.zeros((F,), jnp.float32),
            "w2": w((F, D)), "b2": jnp.zeros((D,), jnp.float32),
            "ln2_g": jnp.ones((D,), jnp.float32),
            "ln2_b": jnp.zeros((D,), jnp.float32),
        })
    return params


if __name__ == "__main__":
    cfg = dict(vocab=50, max_pos=16, hidden=32, heads=4, layers=2,
               ffn=128, clf_hidden=16, classes=5)
    B, S = 2, 8

    key = jax.random.PRNGKey(0)
    k_params, k_ids = jax.random.split(key)
    params = init_params(k_params, cfg)

    input_ids = jax.random.randint(k_ids, (B, S), 0, cfg["vocab"], jnp.int32)
    attention_masks = jnp.array(
        [[1, 1, 1, 1, 1, 1, 1, 1],
         [1, 1, 1, 1, 1, 1, 0, 0]], dtype=jnp.float32)

    fwd = jax.jit(functools.partial(bert_classifier_forward, cfg=cfg))
    logits = fwd(params, input_ids, attention_masks)
    jax.block_until_ready(logits)

    assert logits.shape == (B, cfg["classes"])
    assert bool(jnp.all(jnp.isfinite(logits)))
    print("KERNEL_OK")
</pallas_src>

<mosaic_0001>
module attributes {stable_mosaic.version = 11 : i64} {
  func.func @_linear_fullk_kernel(%arg0: i32, %arg1: i32, %arg2: memref<16x32xbf16, #tpu.memory_space<vmem>>, %arg3: memref<32x96xbf16, #tpu.memory_space<vmem>>, %arg4: memref<1x96xf32, #tpu.memory_space<vmem>>, %arg5: memref<16x96xbf16, #tpu.memory_space<vmem>>) attributes {dimension_semantics = [#tpu.dimension_semantics<parallel>, #tpu.dimension_semantics<parallel>], iteration_bounds = array<i64: 1, 1>, scalar_prefetch = 0 : i64, scratch_operands = 0 : i64, tpu.core_type = #tpu.core_type<tc>, window_params = [{transform_indices = @transform_0, window_bounds = array<i64: 16, 32>}, {transform_indices = @transform_1, window_bounds = array<i64: 32, 96>}, {transform_indices = @transform_2, window_bounds = array<i64: 1, 96>}, {transform_indices = @transform_3, window_bounds = array<i64: 16, 96>}]} {
    %c0 = arith.constant 0 : index
    %c0_0 = arith.constant 0 : index
    %0 = vector.load %arg2[%c0, %c0_0] : memref<16x32xbf16, #tpu.memory_space<vmem>>, vector<16x32xbf16>
    %c0_1 = arith.constant 0 : index
    %c0_2 = arith.constant 0 : index
    %1 = vector.load %arg3[%c0_1, %c0_2] : memref<32x96xbf16, #tpu.memory_space<vmem>>, vector<32x96xbf16>
    %cst = arith.constant dense<0.000000e+00> : vector<16x96xf32>
    %2 = tpu.matmul %0, %1, %cst {dimension_numbers = #tpu.dot_dimension_numbers<[1], [0], [0], [1], [0, 0, 1, 1], [], []>} : vector<16x32xbf16>, vector<32x96xbf16>, vector<16x96xf32> -> vector<16x96xf32>
    %c0_3 = arith.constant 0 : index
    %c0_4 = arith.constant 0 : index
    %3 = vector.load %arg4[%c0_3, %c0_4] : memref<1x96xf32, #tpu.memory_space<vmem>>, vector<1x96xf32>
    %4 = vector.broadcast %3 : vector<1x96xf32> to vector<16x96xf32>
    %5 = arith.addf %2, %4 : vector<16x96xf32>
    %6 = arith.truncf %5 : vector<16x96xf32> to vector<16x96xbf16>
    %c0_5 = arith.constant 0 : index
    %c0_6 = arith.constant 0 : index
    %7 = vector.load %arg5[%c0_5, %c0_6] : memref<16x96xbf16, #tpu.memory_space<vmem>>, vector<16x96xbf16>
    tpu.vector_store %arg5[%c0_5, %c0_6], %6 {strides = array<i32>} : memref<16x96xbf16, #tpu.memory_space<vmem>>, vector<16x96xbf16>,
    return
  }
  func.func @transform_0(%arg0: i32, %arg1: i32) -> (i32, i32) {
    %c0_i32 = arith.constant 0 : i32
    %c0_i32_0 = arith.constant 0 : i32
    return %arg0, %c0_i32 : i32, i32
  }
  func.func @transform_1(%arg0: i32, %arg1: i32) -> (i32, i32) {
    %c0_i32 = arith.constant 0 : i32
    %c0_i32_0 = arith.constant 0 : i32
    return %c0_i32, %arg1 : i32, i32
  }
  func.func @transform_2(%arg0: i32, %arg1: i32) -> (i32, i32) {
    %c0_i32 = arith.constant 0 : i32
    %c0_i32_0 = arith.constant 0 : i32
    return %c0_i32, %arg1 : i32, i32
  }
  func.func @transform_3(%arg0: i32, %arg1: i32) -> (i32, i32) {
    %c0_i32 = arith.constant 0 : i32
    return %arg0, %arg1 : i32, i32
  }
}

module attributes {stable_mosaic.version = 11 : i64} {
  func.func @_linear_res_ln_fullk_kernel(%arg0: i32, %arg1: memref<16x32xbf16, #tpu.memory_space<vmem>>, %arg2: memref<32x32xbf16, #tpu.memory_space<vmem>>, %arg3: memref<1x32xf32, #tpu.memory_space<vmem>>, %arg4: memref<16x32xbf16, #tpu.memory_space<vmem>>, %arg5: memref<1x32xf32, #tpu.memory_space<vmem>>, %arg6: memref<1x32xf32, #tpu.memory_space<vmem>>, %arg7: memref<16x32xbf16, #tpu.memory_space<vmem>>) attributes {dimension_semantics = [#tpu.dimension_semantics<parallel>], iteration_bounds = array<i64: 1>, scalar_prefetch = 0 : i64, scratch_operands = 0 : i64, tpu.core_type = #tpu.core_type<tc>, window_params = [{transform_indices = @transform_0, window_bounds = array<i64: 16, 32>}, {pipeline_mode = #tpu.pipeline_mode<synchronous>, transform_indices = @transform_1, window_bounds = array<i64: 32, 32>}, {pipeline_mode = #tpu.pipeline_mode<synchronous>, transform_indices = @transform_2, window_bounds = array<i64: 1, 32>}, {transform_indices = @transform_3, window_bounds = array<i64: 16, 32>}, {pipeline_mode = #tpu.pipeline_mode<synchronous>, transform_indices = @transform_4, window_bounds = array<i64: 1, 32>}, {pipeline_mode = #tpu.pipeline_mode<synchronous>, transform_indices = @transform_5, window_bounds = array<i64: 1, 32>}, {transform_indices = @transform_6, window_bounds = array<i64: 16, 32>}]} {
    %c0 = arith.constant 0 : index
    %c0_0 = arith.constant 0 : index
    %0 = vector.load %arg1[%c0, %c0_0] : memref<16x32xbf16, #tpu.memory_space<vmem>>, vector<16x32xbf16>
    %c0_1 = arith.constant 0 : index
    %c0_2 = arith.constant 0 : index
    %1 = vector.load %arg2[%c0_1, %c0_2] : memref<32x32xbf16, #tpu.memory_space<vmem>>, vector<32x32xbf16>
    %cst = arith.constant dense<0.000000e+00> : vector<16x32xf32>
    %2 = tpu.matmul %0, %1, %cst {dimension_numbers = #tpu.dot_dimension_numbers<[1], [0], [0], [1], [0, 0, 1, 1], [], []>} : vector<16x32xbf16>, vector<32x32xbf16>, vector<16x32xf32> -> vector<16x32xf32>
    %c0_3 = arith.constant 0 : index
    %c0_4 = arith.constant 0 : index
    %3 = vector.load %arg3[%c0_3, %c0_4] : memref<1x32xf32, #tpu.memory_space<vmem>>, vector<1x32xf32>
    %4 = vector.broadcast %3 : vector<1x32xf32> to vector<16x32xf32>
    %5 = arith.addf %2, %4 : vector<16x32xf32>
    %c0_5 = arith.constant 0 : index
    %c0_6 = arith.constant 0 : index
    %6 = vector.load %arg4[%c0_5, %c0_6] : memref<16x32xbf16, #tpu.memory_space<vmem>>, vector<16x32xbf16>
    %7 = arith.extf %6 : vector<16x32xbf16> to vector<16x32xf32>
    %8 = arith.addf %5, %7 : vector<16x32xf32>
    %c0_7 = arith.constant 0 : index
    %c0_8 = arith.constant 0 : index
    %9 = vector.load %arg5[%c0_7, %c0_8] : memref<1x32xf32, #tpu.memory_space<vmem>>, vector<1x32xf32>
    %c0_9 = arith.constant 0 : index
    %c0_10 = arith.constant 0 : index
    %10 = vector.load %arg6[%c0_9, %c0_10] : memref<1x32xf32, #tpu.memory_space<vmem>>, vector<1x32xf32>
    %cst_11 = arith.constant dense<0.000000e+00> : vector<16xf32>
    %11 = vector.multi_reduction <add>, %8, %cst_11 [1] : vector<16x32xf32> to vector<16xf32>
    %12 = vector.shape_cast %11 : vector<16xf32> to vector<16x1xf32>
    %cst_12 = arith.constant 3.200000e+01 : f32
    %13 = vector.broadcast %cst_12 : f32 to vector<16x1xf32>
    %14 = arith.divf %12, %13 : vector<16x1xf32>
    %15 = vector.broadcast %14 : vector<16x1xf32> to vector<16x32xf32>
    %16 = arith.subf %8, %15 : vector<16x32xf32>
    %17 = arith.mulf %16, %16 : vector<16x32xf32>
    %cst_13 = arith.constant dense<0.000000e+00> : vector<16xf32>
    %18 = vector.multi_reduction <add>, %17, %cst_13 [1] : vector<16x32xf32> to vector<16xf32>
    %19 = vector.shape_cast %18 : vector<16xf32> to vector<16x1xf32>
    %cst_14 = arith.constant 3.200000e+01 : f32
    %20 = vector.broadcast %cst_14 : f32 to vector<16x1xf32>
    %21 = arith.divf %19, %20 : vector<16x1xf32>
    %22 = vector.broadcast %14 : vector<16x1xf32> to vector<16x32xf32>
    %23 = arith.subf %8, %22 : vector<16x32xf32>
    %cst_15 = arith.constant 9.99999996E-13 : f32
    %24 = vector.broadcast %cst_15 : f32 to vector<16x1xf32>
    %25 = arith.addf %21, %24 : vector<16x1xf32>
    %26 = math.rsqrt %25 : vector<16x1xf32>
    %27 = vector.broadcast %26 : vector<16x1xf32> to vector<16x32xf32>
    %28 = arith.mulf %23, %27 : vector<16x32xf32>
    %29 = vector.broadcast %9 : vector<1x32xf32> to vector<16x32xf32>
    %30 = arith.mulf %28, %29 : vector<16x32xf32>
    %31 = vector.broadcast %10 : vector<1x32xf32> to vector<16x32xf32>
    %32 = arith.addf %30, %31 : vector<16x32xf32>
    %33 = arith.truncf %32 : vector<16x32xf32> to vector<16x32xbf16>
    %c0_16 = arith.constant 0 : index
    %c0_17 = arith.constant 0 : index
    %34 = vector.load %arg7[%c0_16, %c0_17] : memref<16x32xbf16, #tpu.memory_space<vmem>>, vector<16x32xbf16>
    tpu.vector_store %arg7[%c0_16, %c0_17], %33 {strides = array<i32>} : memref<16x32xbf16, #tpu.memory_space<vmem>>, vector<16x32xbf16>,
    return
  }
  func.func @transform_0(%arg0: i32) -> (i32, i32) {
    %c0_i32 = arith.constant 0 : i32
    %c0_i32_0 = arith.constant 0 : i32
    return %arg0, %c0_i32 : i32, i32
  }
  func.func @transform_1(%arg0: i32) -> (i32, i32) {
    %c0_i32 = arith.constant 0 : i32
    %c0_i32_0 = arith.constant 0 : i32
    %c0_i32_1 = arith.constant 0 : i32
    return %c0_i32, %c0_i32_0 : i32, i32
  }
  func.func @transform_2(%arg0: i32) -> (i32, i32) {
    %c0_i32 = arith.constant 0 : i32
    %c0_i32_0 = arith.constant 0 : i32
    %c0_i32_1 = arith.constant 0 : i32
    return %c0_i32, %c0_i32_0 : i32, i32
  }
  func.func @transform_3(%arg0: i32) -> (i32, i32) {
    %c0_i32 = arith.constant 0 : i32
    %c0_i32_0 = arith.constant 0 : i32
    return %arg0, %c0_i32 : i32, i32
  }
  func.func @transform_4(%arg0: i32) -> (i32, i32) {
    %c0_i32 = arith.constant 0 : i32
    %c0_i32_0 = arith.constant 0 : i32
    %c0_i32_1 = arith.constant 0 : i32
    return %c0_i32, %c0_i32_0 : i32, i32
  }
  func.func @transform_5(%arg0: i32) -> (i32, i32) {
    %c0_i32 = arith.constant 0 : i32
    %c0_i32_0 = arith.constant 0 : i32
    %c0_i32_1 = arith.constant 0 : i32
    return %c0_i32, %c0_i32_0 : i32, i32
  }
  func.func @transform_6(%arg0: i32) -> (i32, i32) {
    %c0_i32 = arith.constant 0 : i32
    %c0_i32_0 = arith.constant 0 : i32
    return %arg0, %c0_i32 : i32, i32
  }
}

module attributes {stable_mosaic.version = 11 : i64} {
  func.func @_embed_ln_kernel(%arg0: i32, %arg1: memref<1x8x32xf32, #tpu.memory_space<vmem>>, %arg2: memref<8x32xf32, #tpu.memory_space<vmem>>, %arg3: memref<1x32xf32, #tpu.memory_space<vmem>>, %arg4: memref<1x32xf32, #tpu.memory_space<vmem>>, %arg5: memref<1x32xf32, #tpu.memory_space<vmem>>, %arg6: memref<1x8x32xbf16, #tpu.memory_space<vmem>>) attributes {dimension_semantics = [#tpu.dimension_semantics<parallel>], iteration_bounds = array<i64: 2>, scalar_prefetch = 0 : i64, scratch_operands = 0 : i64, tpu.core_type = #tpu.core_type<tc>, window_params = [{transform_indices = @transform_0, window_bounds = array<i64: 1, 8, 32>}, {pipeline_mode = #tpu.pipeline_mode<synchronous>, transform_indices = @transform_1, window_bounds = array<i64: 8, 32>}, {pipeline_mode = #tpu.pipeline_mode<synchronous>, transform_indices = @transform_2, window_bounds = array<i64: 1, 32>}, {pipeline_mode = #tpu.pipeline_mode<synchronous>, transform_indices = @transform_3, window_bounds = array<i64: 1, 32>}, {pipeline_mode = #tpu.pipeline_mode<synchronous>, transform_indices = @transform_4, window_bounds = array<i64: 1, 32>}, {transform_indices = @transform_5, window_bounds = array<i64: 1, 8, 32>}]} {
    %c0 = arith.constant 0 : index
    %c0_0 = arith.constant 0 : index
    %c0_1 = arith.constant 0 : index
    %0 = vector.load %arg1[%c0, %c0_0, %c0_1] : memref<1x8x32xf32, #tpu.memory_space<vmem>>, vector<1x8x32xf32>
    %1 = vector.shape_cast %0 : vector<1x8x32xf32> to vector<8x32xf32>
    %c0_2 = arith.constant 0 : index
    %c0_3 = arith.constant 0 : index
    %2 = vector.load %arg2[%c0_2, %c0_3] : memref<8x32xf32, #tpu.memory_space<vmem>>, vector<8x32xf32>
    %3 = arith.addf %1, %2 : vector<8x32xf32>
    %c0_4 = arith.constant 0 : index
    %c0_5 = arith.constant 0 : index
    %4 = vector.load %arg3[%c0_4, %c0_5] : memref<1x32xf32, #tpu.memory_space<vmem>>, vector<1x32xf32>
    %5 = vector.broadcast %4 : vector<1x32xf32> to vector<8x32xf32>
    %6 = arith.addf %3, %5 : vector<8x32xf32>
    %c0_6 = arith.constant 0 : index
    %c0_7 = arith.constant 0 : index
    %7 = vector.load %arg4[%c0_6, %c0_7] : memref<1x32xf32, #tpu.memory_space<vmem>>, vector<1x32xf32>
    %c0_8 = arith.constant 0 : index
    %c0_9 = arith.constant 0 : index
    %8 = vector.load %arg5[%c0_8, %c0_9] : memref<1x32xf32, #tpu.memory_space<vmem>>, vector<1x32xf32>
    %cst = arith.constant dense<0.000000e+00> : vector<8xf32>
    %9 = vector.multi_reduction <add>, %6, %cst [1] : vector<8x32xf32> to vector<8xf32>
    %10 = vector.shape_cast %9 : vector<8xf32> to vector<8x1xf32>
    %cst_10 = arith.constant 3.200000e+01 : f32
    %11 = vector.broadcast %cst_10 : f32 to vector<8x1xf32>
    %12 = arith.divf %10, %11 : vector<8x1xf32>
    %13 = vector.broadcast %12 : vector<8x1xf32> to vector<8x32xf32>
    %14 = arith.subf %6, %13 : vector<8x32xf32>
    %15 = arith.mulf %14, %14 : vector<8x32xf32>
    %cst_11 = arith.constant dense<0.000000e+00> : vector<8xf32>
    %16 = vector.multi_reduction <add>, %15, %cst_11 [1] : vector<8x32xf32> to vector<8xf32>
    %17 = vector.shape_cast %16 : vector<8xf32> to vector<8x1xf32>
    %cst_12 = arith.constant 3.200000e+01 : f32
    %18 = vector.broadcast %cst_12 : f32 to vector<8x1xf32>
    %19 = arith.divf %17, %18 : vector<8x1xf32>
    %20 = vector.broadcast %12 : vector<8x1xf32> to vector<8x32xf32>
    %21 = arith.subf %6, %20 : vector<8x32xf32>
    %cst_13 = arith.constant 9.99999996E-13 : f32
    %22 = vector.broadcast %cst_13 : f32 to vector<8x1xf32>
    %23 = arith.addf %19, %22 : vector<8x1xf32>
    %24 = math.rsqrt %23 : vector<8x1xf32>
    %25 = vector.broadcast %24 : vector<8x1xf32> to vector<8x32xf32>
    %26 = arith.mulf %21, %25 : vector<8x32xf32>
    %27 = vector.broadcast %7 : vector<1x32xf32> to vector<8x32xf32>
    %28 = arith.mulf %26, %27 : vector<8x32xf32>
    %29 = vector.broadcast %8 : vector<1x32xf32> to vector<8x32xf32>
    %30 = arith.addf %28, %29 : vector<8x32xf32>
    %31 = arith.truncf %30 : vector<8x32xf32> to vector<8x32xbf16>
    %c0_14 = arith.constant 0 : index
    %c0_15 = arith.constant 0 : index
    %c0_16 = arith.constant 0 : index
    %32 = vector.load %arg6[%c0_14, %c0_15, %c0_16] : memref<1x8x32xbf16, #tpu.memory_space<vmem>>, vector<1x8x32xbf16>
    %33 = vector.shape_cast %32 : vector<1x8x32xbf16> to vector<8x32xbf16>
    %34 = vector.shape_cast %31 : vector<8x32xbf16> to vector<1x8x32xbf16>
    tpu.vector_store %arg6[%c0_14, %c0_15, %c0_16], %34 {strides = array<i32>} : memref<1x8x32xbf16, #tpu.memory_space<vmem>>, vector<1x8x32xbf16>,
    return
  }
  func.func @transform_0(%arg0: i32) -> (i32, i32, i32) {
    %c0_i32 = arith.constant 0 : i32
    %c0_i32_0 = arith.constant 0 : i32
    %c0_i32_1 = arith.constant 0 : i32
    return %arg0, %c0_i32, %c0_i32_0 : i32, i32, i32
  }
  func.func @transform_1(%arg0: i32) -> (i32, i32) {
    %c0_i32 = arith.constant 0 : i32
    %c0_i32_0 = arith.constant 0 : i32
    %c0_i32_1 = arith.constant 0 : i32
    return %c0_i32, %c0_i32_0 : i32, i32
  }
  func.func @transform_2(%arg0: i32) -> (i32, i32) {
    %c0_i32 = arith.constant 0 : i32
    %c0_i32_0 = arith.constant 0 : i32
    %c0_i32_1 = arith.constant 0 : i32
    return %c0_i32, %c0_i32_0 : i32, i32
  }
  func.func @transform_3(%arg0: i32) -> (i32, i32) {
    %c0_i32 = arith.constant 0 : i32
    %c0_i32_0 = arith.constant 0 : i32
    %c0_i32_1 = arith.constant 0 : i32
    return %c0_i32, %c0_i32_0 : i32, i32
  }
  func.func @transform_4(%arg0: i32) -> (i32, i32) {
    %c0_i32 = arith.constant 0 : i32
    %c0_i32_0 = arith.constant 0 : i32
    %c0_i32_1 = arith.constant 0 : i32
    return %c0_i32, %c0_i32_0 : i32, i32
  }
  func.func @transform_5(%arg0: i32) -> (i32, i32, i32) {
    %c0_i32 = arith.constant 0 : i32
    %c0_i32_0 = arith.constant 0 : i32
    %c0_i32_1 = arith.constant 0 : i32
    return %arg0, %c0_i32, %c0_i32_0 : i32, i32, i32
  }
}

module attributes {stable_mosaic.version = 11 : i64} {
  func.func @_attn_kernel(%arg0: i32, %arg1: memref<1x8x96xbf16, #tpu.memory_space<vmem>>, %arg2: memref<1x1x8xf32, #tpu.memory_space<vmem>>, %arg3: memref<1x8x32xbf16, #tpu.memory_space<vmem>>) attributes {dimension_semantics = [#tpu.dimension_semantics<parallel>], iteration_bounds = array<i64: 2>, scalar_prefetch = 0 : i64, scratch_operands = 0 : i64, tpu.core_type = #tpu.core_type<tc>, window_params = [{transform_indices = @transform_0, window_bounds = array<i64: 1, 8, 96>}, {transform_indices = @transform_1, window_bounds = array<i64: 1, 1, 8>}, {transform_indices = @transform_2, window_bounds = array<i64: 1, 8, 32>}]} {
    %c0 = arith.constant 0 : index
    %c0_0 = arith.constant 0 : index
    %c0_1 = arith.constant 0 : index
    %0 = vector.load %arg1[%c0, %c0_0, %c0_1] : memref<1x8x96xbf16, #tpu.memory_space<vmem>>, vector<1x8x96xbf16>
    %1 = vector.shape_cast %0 : vector<1x8x96xbf16> to vector<8x96xbf16>
    %c0_2 = arith.constant 0 : index
    %c0_3 = arith.constant 0 : index
    %c0_4 = arith.constant 0 : index
    %2 = vector.load %arg2[%c0_2, %c0_3, %c0_4] : memref<1x1x8xf32, #tpu.memory_space<vmem>>, vector<1x1x8xf32>
    %3 = vector.shape_cast %2 : vector<1x1x8xf32> to vector<1x8xf32>
    %cst = arith.constant 1.000000e+00 : f32
    %4 = vector.broadcast %cst : f32 to vector<1x8xf32>
    %5 = arith.subf %4, %3 : vector<1x8xf32>
    %cst_5 = arith.constant -1.000000e+09 : f32
    %6 = vector.broadcast %cst_5 : f32 to vector<1x8xf32>
    %7 = arith.mulf %5, %6 : vector<1x8xf32>
    %8 = vector.extract_strided_slice %1 {offsets = [0, 0], sizes = [8, 8], strides = [1, 1]} : vector<8x96xbf16> to vector<8x8xbf16>
    %9 = vector.extract_strided_slice %1 {offsets = [0, 32], sizes = [8, 8], strides = [1, 1]} : vector<8x96xbf16> to vector<8x8xbf16>
    %10 = vector.extract_strided_slice %1 {offsets = [0, 64], sizes = [8, 8], strides = [1, 1]} : vector<8x96xbf16> to vector<8x8xbf16>
    "tpu.trace_start"() <{level = 10 : i32, message = "qd,kd->qk"}> : () -> ()
    %cst_6 = arith.constant dense<0.000000e+00> : vector<8x8xf32>
    %11 = tpu.matmul %8, %9, %cst_6 {dimension_numbers = #tpu.dot_dimension_numbers<[1], [1], [0], [0], [0, 0, 1, 0], [], []>} : vector<8x8xbf16>, vector<8x8xbf16>, vector<8x8xf32> -> vector<8x8xf32>
    "tpu.trace_stop"() : () -> ()
    %cst_7 = arith.constant 0.353553385 : f32
    %12 = vector.broadcast %cst_7 : f32 to vector<8x8xf32>
    %13 = arith.mulf %11, %12 : vector<8x8xf32>
    %14 = vector.broadcast %7 : vector<1x8xf32> to vector<8x8xf32>
    %15 = arith.addf %13, %14 : vector<8x8xf32>
    %cst_8 = arith.constant dense<0xFF800000> : vector<8xf32>
    %16 = vector.multi_reduction <maximumf>, %15, %cst_8 [1] : vector<8x8xf32> to vector<8xf32>
    %17 = vector.shape_cast %16 : vector<8xf32> to vector<8x1xf32>
    %18 = vector.broadcast %17 : vector<8x1xf32> to vector<8x8xf32>
    %19 = arith.subf %15, %18 : vector<8x8xf32>
    %20 = math.exp %19 : vector<8x8xf32>
    %cst_9 = arith.constant dense<0.000000e+00> : vector<8xf32>
    %21 = vector.multi_reduction <add>, %20, %cst_9 [1] : vector<8x8xf32> to vector<8xf32>
    %22 = vector.shape_cast %21 : vector<8xf32> to vector<8x1xf32>
    %23 = tpu.reciprocal %22 {approx = true} : vector<8x1xf32> -> vector<8x1xf32>
    %24 = vector.broadcast %23 : vector<8x1xf32> to vector<8x8xf32>
    %25 = arith.mulf %20, %24 : vector<8x8xf32>
    %26 = arith.truncf %25 : vector<8x8xf32> to vector<8x8xbf16>
    %cst_10 = arith.constant dense<0.000000e+00> : vector<8x8xf32>
    %27 = tpu.matmul %26, %10, %cst_10 {dimension_numbers = #tpu.dot_dimension_numbers<[1], [0], [0], [1], [0, 0, 1, 1], [], []>} : vector<8x8xbf16>, vector<8x8xbf16>, vector<8x8xf32> -> vector<8x8xf32>
    %28 = vector.extract_strided_slice %1 {offsets = [0, 8], sizes = [8, 8], strides = [1, 1]} : vector<8x96xbf16> to vector<8x8xbf16>
    %29 = vector.extract_strided_slice %1 {offsets = [0, 40], sizes = [8, 8], strides = [1, 1]} : vector<8x96xbf16> to vector<8x8xbf16>
    %30 = vector.extract_strided_slice %1 {offsets = [0, 72], sizes = [8, 8], strides = [1, 1]} : vector<8x96xbf16> to vector<8x8xbf16>
    "tpu.trace_start"() <{level = 10 : i32, message = "qd,kd->qk"}> : () -> ()
    %cst_11 = arith.constant dense<0.000000e+00> : vector<8x8xf32>
    %31 = tpu.matmul %28, %29, %cst_11 {dimension_numbers = #tpu.dot_dimension_numbers<[1], [1], [0], [0], [0, 0, 1, 0], [], []>} : vector<8x8xbf16>, vector<8x8xbf16>, vector<8x8xf32> -> vector<8x8xf32>
    "tpu.trace_stop"() : () -> ()
    %cst_12 = arith.constant 0.353553385 : f32
    %32 = vector.broadcast %cst_12 : f32 to vector<8x8xf32>
    %33 = arith.mulf %31, %32 : vector<8x8xf32>
    %34 = vector.broadcast %7 : vector<1x8xf32> to vector<8x8xf32>
    %35 = arith.addf %33, %34 : vector<8x8xf32>
    %cst_13 = arith.constant dense<0xFF800000> : vector<8xf32>
    %36 = vector.multi_reduction <maximumf>, %35, %cst_13 [1] : vector<8x8xf32> to vector<8xf32>
    %37 = vector.shape_cast %36 : vector<8xf32> to vector<8x1xf32>
    %38 = vector.broadcast %37 : vector<8x1xf32> to vector<8x8xf32>
    %39 = arith.subf %35, %38 : vector<8x8xf32>
    %40 = math.exp %39 : vector<8x8xf32>
    %cst_14 = arith.constant dense<0.000000e+00> : vector<8xf32>
    %41 = vector.multi_reduction <add>, %40, %cst_14 [1] : vector<8x8xf32> to vector<8xf32>
    %42 = vector.shape_cast %41 : vector<8xf32> to vector<8x1xf32>
    %43 = tpu.reciprocal %42 {approx = true} : vector<8x1xf32> -> vector<8x1xf32>
    %44 = vector.broadcast %43 : vector<8x1xf32> to vector<8x8xf32>
    %45 = arith.mulf %40, %44 : vector<8x8xf32>
    %46 = arith.truncf %45 : vector<8x8xf32> to vector<8x8xbf16>
    %cst_15 = arith.constant dense<0.000000e+00> : vector<8x8xf32>
    %47 = tpu.matmul %46, %30, %cst_15 {dimension_numbers = #tpu.dot_dimension_numbers<[1], [0], [0], [1], [0, 0, 1, 1], [], []>} : vector<8x8xbf16>, vector<8x8xbf16>, vector<8x8xf32> -> vector<8x8xf32>
    %48 = vector.extract_strided_slice %1 {offsets = [0, 16], sizes = [8, 8], strides = [1, 1]} : vector<8x96xbf16> to vector<8x8xbf16>
    %49 = vector.extract_strided_slice %1 {offsets = [0, 48], sizes = [8, 8], strides = [1, 1]} : vector<8x96xbf16> to vector<8x8xbf16>
    %50 = vector.extract_strided_slice %1 {offsets = [0, 80], sizes = [8, 8], strides = [1, 1]} : vector<8x96xbf16> to vector<8x8xbf16>
    "tpu.trace_start"() <{level = 10 : i32, message = "qd,kd->qk"}> : () -> ()
    %cst_16 = arith.constant dense<0.000000e+00> : vector<8x8xf32>
    %51 = tpu.matmul %48, %49, %cst_16 {dimension_numbers = #tpu.dot_dimension_numbers<[1], [1], [0], [0], [0, 0, 1, 0], [], []>} : vector<8x8xbf16>, vector<8x8xbf16>, vector<8x8xf32> -> vector<8x8xf32>
    "tpu.trace_stop"() : () -> ()
    %cst_17 = arith.constant 0.353553385 : f32
    %52 = vector.broadcast %cst_17 : f32 to vector<8x8xf32>
    %53 = arith.mulf %51, %52 : vector<8x8xf32>
    %54 = vector.broadcast %7 : vector<1x8xf32> to vector<8x8xf32>
    %55 = arith.addf %53, %54 : vector<8x8xf32>
    %cst_18 = arith.constant dense<0xFF800000> : vector<8xf32>
    %56 = vector.multi_reduction <maximumf>, %55, %cst_18 [1] : vector<8x8xf32> to vector<8xf32>
    %57 = vector.shape_cast %56 : vector<8xf32> to vector<8x1xf32>
    %58 = vector.broadcast %57 : vector<8x1xf32> to vector<8x8xf32>
    %59 = arith.subf %55, %58 : vector<8x8xf32>
    %60 = math.exp %59 : vector<8x8xf32>
    %cst_19 = arith.constant dense<0.000000e+00> : vector<8xf32>
    %61 = vector.multi_reduction <add>, %60, %cst_19 [1] : vector<8x8xf32> to vector<8xf32>
    %62 = vector.shape_cast %61 : vector<8xf32> to vector<8x1xf32>
    %63 = tpu.reciprocal %62 {approx = true} : vector<8x1xf32> -> vector<8x1xf32>
    %64 = vector.broadcast %63 : vector<8x1xf32> to vector<8x8xf32>
    %65 = arith.mulf %60, %64 : vector<8x8xf32>
    %66 = arith.truncf %65 : vector<8x8xf32> to vector<8x8xbf16>
    %cst_20 = arith.constant dense<0.000000e+00> : vector<8x8xf32>
    %67 = tpu.matmul %66, %50, %cst_20 {dimension_numbers = #tpu.dot_dimension_numbers<[1], [0], [0], [1], [0, 0, 1, 1], [], []>} : vector<8x8xbf16>, vector<8x8xbf16>, vector<8x8xf32> -> vector<8x8xf32>
    %68 = vector.extract_strided_slice %1 {offsets = [0, 24], sizes = [8, 8], strides = [1, 1]} : vector<8x96xbf16> to vector<8x8xbf16>
    %69 = vector.extract_strided_slice %1 {offsets = [0, 56], sizes = [8, 8], strides = [1, 1]} : vector<8x96xbf16> to vector<8x8xbf16>
    %70 = vector.extract_strided_slice %1 {offsets = [0, 88], sizes = [8, 8], strides = [1, 1]} : vector<8x96xbf16> to vector<8x8xbf16>
    "tpu.trace_start"() <{level = 10 : i32, message = "qd,kd->qk"}> : () -> ()
    %cst_21 = arith.constant dense<0.000000e+00> : vector<8x8xf32>
    %71 = tpu.matmul %68, %69, %cst_21 {dimension_numbers = #tpu.dot_dimension_numbers<[1], [1], [0], [0], [0, 0, 1, 0], [], []>} : vector<8x8xbf16>, vector<8x8xbf16>, vector<8x8xf32> -> vector<8x8xf32>
    "tpu.trace_stop"() : () -> ()
    %cst_22 = arith.constant 0.353553385 : f32
    %72 = vector.broadcast %cst_22 : f32 to vector<8x8xf32>
    %73 = arith.mulf %71, %72 : vector<8x8xf32>
    %74 = vector.broadcast %7 : vector<1x8xf32> to vector<8x8xf32>
    %75 = arith.addf %73, %74 : vector<8x8xf32>
    %cst_23 = arith.constant dense<0xFF800000> : vector<8xf32>
    %76 = vector.multi_reduction <maximumf>, %75, %cst_23 [1] : vector<8x8xf32> to vector<8xf32>
    %77 = vector.shape_cast %76 : vector<8xf32> to vector<8x1xf32>
    %78 = vector.broadcast %77 : vector<8x1xf32> to vector<8x8xf32>
    %79 = arith.subf %75, %78 : vector<8x8xf32>
    %80 = math.exp %79 : vector<8x8xf32>
    %cst_24 = arith.constant dense<0.000000e+00> : vector<8xf32>
    %81 = vector.multi_reduction <add>, %80, %cst_24 [1] : vector<8x8xf32> to vector<8xf32>
    %82 = vector.shape_cast %81 : vector<8xf32> to vector<8x1xf32>
    %83 = tpu.reciprocal %82 {approx = true} : vector<8x1xf32> -> vector<8x1xf32>
    %84 = vector.broadcast %83 : vector<8x1xf32> to vector<8x8xf32>
    %85 = arith.mulf %80, %84 : vector<8x8xf32>
    %86 = arith.truncf %85 : vector<8x8xf32> to vector<8x8xbf16>
    %cst_25 = arith.constant dense<0.000000e+00> : vector<8x8xf32>
    %87 = tpu.matmul %86, %70, %cst_25 {dimension_numbers = #tpu.dot_dimension_numbers<[1], [0], [0], [1], [0, 0, 1, 1], [], []>} : vector<8x8xbf16>, vector<8x8xbf16>, vector<8x8xf32> -> vector<8x8xf32>
    %88 = tpu.concatenate %27, %47, %67, %87 in 1 : vector<8x8xf32>, vector<8x8xf32>, vector<8x8xf32>, vector<8x8xf32> -> vector<8x32xf32>
    %89 = arith.truncf %88 : vector<8x32xf32> to vector<8x32xbf16>
    %c0_26 = arith.constant 0 : index
    %c0_27 = arith.constant 0 : index
    %c0_28 = arith.constant 0 : index
    %90 = vector.load %arg3[%c0_26, %c0_27, %c0_28] : memref<1x8x32xbf16, #tpu.memory_space<vmem>>, vector<1x8x32xbf16>
    %91 = vector.shape_cast %90 : vector<1x8x32xbf16> to vector<8x32xbf16>
    %92 = vector.shape_cast %89 : vector<8x32xbf16> to vector<1x8x32xbf16>
    tpu.vector_store %arg3[%c0_26, %c0_27, %c0_28], %92 {strides = array<i32>} : memref<1x8x32xbf16, #tpu.memory_space<vmem>>, vector<1x8x32xbf16>,
    return
  }
  func.func @transform_0(%arg0: i32) -> (i32, i32, i32) {
    %c0_i32 = arith.constant 0 : i32
    %c0_i32_0 = arith.constant 0 : i32
    %c0_i32_1 = arith.constant 0 : i32
    return %arg0, %c0_i32, %c0_i32_0 : i32, i32, i32
  }
  func.func @transform_1(%arg0: i32) -> (i32, i32, i32) {
    %c0_i32 = arith.constant 0 : i32
    %c0_i32_0 = arith.constant 0 : i32
    %c0_i32_1 = arith.constant 0 : i32
    return %arg0, %c0_i32, %c0_i32_0 : i32, i32, i32
  }
  func.func @transform_2(%arg0: i32) -> (i32, i32, i32) {
    %c0_i32 = arith.constant 0 : i32
    %c0_i32_0 = arith.constant 0 : i32
    %c0_i32_1 = arith.constant 0 : i32
    return %arg0, %c0_i32, %c0_i32_0 : i32, i32, i32
  }
}

module attributes {stable_mosaic.version = 11 : i64} {
  func.func @_linear_fullk_kernel(%arg0: i32, %arg1: i32, %arg2: memref<16x32xbf16, #tpu.memory_space<vmem>>, %arg3: memref<32x128xbf16, #tpu.memory_space<vmem>>, %arg4: memref<1x128xf32, #tpu.memory_space<vmem>>, %arg5: memref<16x128xbf16, #tpu.memory_space<vmem>>) attributes {dimension_semantics = [#tpu.dimension_semantics<parallel>, #tpu.dimension_semantics<parallel>], iteration_bounds = array<i64: 1, 1>, scalar_prefetch = 0 : i64, scratch_operands = 0 : i64, tpu.core_type = #tpu.core_type<tc>, window_params = [{transform_indices = @transform_0, window_bounds = array<i64: 16, 32>}, {transform_indices = @transform_1, window_bounds = array<i64: 32, 128>}, {transform_indices = @transform_2, window_bounds = array<i64: 1, 128>}, {transform_indices = @transform_3, window_bounds = array<i64: 16, 128>}]} {
    %c0 = arith.constant 0 : index
    %c0_0 = arith.constant 0 : index
    %0 = vector.load %arg2[%c0, %c0_0] : memref<16x32xbf16, #tpu.memory_space<vmem>>, vector<16x32xbf16>
    %c0_1 = arith.constant 0 : index
    %c0_2 = arith.constant 0 : index
    %1 = vector.load %arg3[%c0_1, %c0_2] : memref<32x128xbf16, #tpu.memory_space<vmem>>, vector<32x128xbf16>
    %cst = arith.constant dense<0.000000e+00> : vector<16x128xf32>
    %2 = tpu.matmul %0, %1, %cst {dimension_numbers = #tpu.dot_dimension_numbers<[1], [0], [0], [1], [0, 0, 1, 1], [], []>} : vector<16x32xbf16>, vector<32x128xbf16>, vector<16x128xf32> -> vector<16x128xf32>
    %c0_3 = arith.constant 0 : index
    %c0_4 = arith.constant 0 : index
    %3 = vector.load %arg4[%c0_3, %c0_4] : memref<1x128xf32, #tpu.memory_space<vmem>>, vector<1x128xf32>
    %4 = vector.broadcast %3 : vector<1x128xf32> to vector<16x128xf32>
    %5 = arith.addf %2, %4 : vector<16x128xf32>
    %6 = arith.mulf %5, %5 : vector<16x128xf32>
    %7 = arith.mulf %5, %6 : vector<16x128xf32>
    %cst_5 = arith.constant 4.471500e-02 : f32
    %8 = vector.broadcast %cst_5 : f32 to vector<16x128xf32>
    %9 = arith.mulf %8, %7 : vector<16x128xf32>
    %10 = arith.addf %5, %9 : vector<16x128xf32>
    %cst_6 = arith.constant 0.797884583 : f32
    %11 = vector.broadcast %cst_6 : f32 to vector<16x128xf32>
    %12 = arith.mulf %11, %10 : vector<16x128xf32>
    %13 = math.tanh %12 : vector<16x128xf32>
    %cst_7 = arith.constant 1.000000e+00 : f32
    %14 = vector.broadcast %cst_7 : f32 to vector<16x128xf32>
    %15 = arith.addf %14, %13 : vector<16x128xf32>
    %cst_8 = arith.constant 5.000000e-01 : f32
    %16 = vector.broadcast %cst_8 : f32 to vector<16x128xf32>
    %17 = arith.mulf %16, %15 : vector<16x128xf32>
    %18 = arith.mulf %5, %17 : vector<16x128xf32>
    %19 = arith.truncf %18 : vector<16x128xf32> to vector<16x128xbf16>
    %c0_9 = arith.constant 0 : index
    %c0_10 = arith.constant 0 : index
    %20 = vector.load %arg5[%c0_9, %c0_10] : memref<16x128xbf16, #tpu.memory_space<vmem>>, vector<16x128xbf16>
    tpu.vector_store %arg5[%c0_9, %c0_10], %19 {strides = array<i32>} : memref<16x128xbf16, #tpu.memory_space<vmem>>, vector<16x128xbf16>,
    return
  }
  func.func @transform_0(%arg0: i32, %arg1: i32) -> (i32, i32) {
    %c0_i32 = arith.constant 0 : i32
    %c0_i32_0 = arith.constant 0 : i32
    return %arg0, %c0_i32 : i32, i32
  }
  func.func @transform_1(%arg0: i32, %arg1: i32) -> (i32, i32) {
    %c0_i32 = arith.constant 0 : i32
    %c0_i32_0 = arith.constant 0 : i32
    return %c0_i32, %arg1 : i32, i32
  }
  func.func @transform_2(%arg0: i32, %arg1: i32) -> (i32, i32) {
    %c0_i32 = arith.constant 0 : i32
    %c0_i32_0 = arith.constant 0 : i32
    return %c0_i32, %arg1 : i32, i32
  }
  func.func @transform_3(%arg0: i32, %arg1: i32) -> (i32, i32) {
    %c0_i32 = arith.constant 0 : i32
    return %arg0, %arg1 : i32, i32
  }
}

module attributes {stable_mosaic.version = 11 : i64} {
  func.func @_linear_res_ln_fullk_kernel(%arg0: i32, %arg1: memref<16x128xbf16, #tpu.memory_space<vmem>>, %arg2: memref<128x32xbf16, #tpu.memory_space<vmem>>, %arg3: memref<1x32xf32, #tpu.memory_space<vmem>>, %arg4: memref<16x32xbf16, #tpu.memory_space<vmem>>, %arg5: memref<1x32xf32, #tpu.memory_space<vmem>>, %arg6: memref<1x32xf32, #tpu.memory_space<vmem>>, %arg7: memref<16x32xbf16, #tpu.memory_space<vmem>>) attributes {dimension_semantics = [#tpu.dimension_semantics<parallel>], iteration_bounds = array<i64: 1>, scalar_prefetch = 0 : i64, scratch_operands = 0 : i64, tpu.core_type = #tpu.core_type<tc>, window_params = [{transform_indices = @transform_0, window_bounds = array<i64: 16, 128>}, {pipeline_mode = #tpu.pipeline_mode<synchronous>, transform_indices = @transform_1, window_bounds = array<i64: 128, 32>}, {pipeline_mode = #tpu.pipeline_mode<synchronous>, transform_indices = @transform_2, window_bounds = array<i64: 1, 32>}, {transform_indices = @transform_3, window_bounds = array<i64: 16, 32>}, {pipeline_mode = #tpu.pipeline_mode<synchronous>, transform_indices = @transform_4, window_bounds = array<i64: 1, 32>}, {pipeline_mode = #tpu.pipeline_mode<synchronous>, transform_indices = @transform_5, window_bounds = array<i64: 1, 32>}, {transform_indices = @transform_6, window_bounds = array<i64: 16, 32>}]} {
    %c0 = arith.constant 0 : index
    %c0_0 = arith.constant 0 : index
    %0 = vector.load %arg1[%c0, %c0_0] : memref<16x128xbf16, #tpu.memory_space<vmem>>, vector<16x128xbf16>
    %c0_1 = arith.constant 0 : index
    %c0_2 = arith.constant 0 : index
    %1 = vector.load %arg2[%c0_1, %c0_2] : memref<128x32xbf16, #tpu.memory_space<vmem>>, vector<128x32xbf16>
    %cst = arith.constant dense<0.000000e+00> : vector<16x32xf32>
    %2 = tpu.matmul %0, %1, %cst {dimension_numbers = #tpu.dot_dimension_numbers<[1], [0], [0], [1], [0, 0, 1, 1], [], []>} : vector<16x128xbf16>, vector<128x32xbf16>, vector<16x32xf32> -> vector<16x32xf32>
    %c0_3 = arith.constant 0 : index
    %c0_4 = arith.constant 0 : index
    %3 = vector.load %arg3[%c0_3, %c0_4] : memref<1x32xf32, #tpu.memory_space<vmem>>, vector<1x32xf32>
    %4 = vector.broadcast %3 : vector<1x32xf32> to vector<16x32xf32>
    %5 = arith.addf %2, %4 : vector<16x32xf32>
    %c0_5 = arith.constant 0 : index
    %c0_6 = arith.constant 0 : index
    %6 = vector.load %arg4[%c0_5, %c0_6] : memref<16x32xbf16, #tpu.memory_space<vmem>>, vector<16x32xbf16>
    %7 = arith.extf %6 : vector<16x32xbf16> to vector<16x32xf32>
    %8 = arith.addf %5, %7 : vector<16x32xf32>
    %c0_7 = arith.constant 0 : index
    %c0_8 = arith.constant 0 : index
    %9 = vector.load %arg5[%c0_7, %c0_8] : memref<1x32xf32, #tpu.memory_space<vmem>>, vector<1x32xf32>
    %c0_9 = arith.constant 0 : index
    %c0_10 = arith.constant 0 : index
    %10 = vector.load %arg6[%c0_9, %c0_10] : memref<1x32xf32, #tpu.memory_space<vmem>>, vector<1x32xf32>
    %cst_11 = arith.constant dense<0.000000e+00> : vector<16xf32>
    %11 = vector.multi_reduction <add>, %8, %cst_11 [1] : vector<16x32xf32> to vector<16xf32>
    %12 = vector.shape_cast %11 : vector<16xf32> to vector<16x1xf32>
    %cst_12 = arith.constant 3.200000e+01 : f32
    %13 = vector.broadcast %cst_12 : f32 to vector<16x1xf32>
    %14 = arith.divf %12, %13 : vector<16x1xf32>
    %15 = vector.broadcast %14 : vector<16x1xf32> to vector<16x32xf32>
    %16 = arith.subf %8, %15 : vector<16x32xf32>
    %17 = arith.mulf %16, %16 : vector<16x32xf32>
    %cst_13 = arith.constant dense<0.000000e+00> : vector<16xf32>
    %18 = vector.multi_reduction <add>, %17, %cst_13 [1] : vector<16x32xf32> to vector<16xf32>
    %19 = vector.shape_cast %18 : vector<16xf32> to vector<16x1xf32>
    %cst_14 = arith.constant 3.200000e+01 : f32
    %20 = vector.broadcast %cst_14 : f32 to vector<16x1xf32>
    %21 = arith.divf %19, %20 : vector<16x1xf32>
    %22 = vector.broadcast %14 : vector<16x1xf32> to vector<16x32xf32>
    %23 = arith.subf %8, %22 : vector<16x32xf32>
    %cst_15 = arith.constant 9.99999996E-13 : f32
    %24 = vector.broadcast %cst_15 : f32 to vector<16x1xf32>
    %25 = arith.addf %21, %24 : vector<16x1xf32>
    %26 = math.rsqrt %25 : vector<16x1xf32>
    %27 = vector.broadcast %26 : vector<16x1xf32> to vector<16x32xf32>
    %28 = arith.mulf %23, %27 : vector<16x32xf32>
    %29 = vector.broadcast %9 : vector<1x32xf32> to vector<16x32xf32>
    %30 = arith.mulf %28, %29 : vector<16x32xf32>
    %31 = vector.broadcast %10 : vector<1x32xf32> to vector<16x32xf32>
    %32 = arith.addf %30, %31 : vector<16x32xf32>
    %33 = arith.truncf %32 : vector<16x32xf32> to vector<16x32xbf16>
    %c0_16 = arith.constant 0 : index
    %c0_17 = arith.constant 0 : index
    %34 = vector.load %arg7[%c0_16, %c0_17] : memref<16x32xbf16, #tpu.memory_space<vmem>>, vector<16x32xbf16>
    tpu.vector_store %arg7[%c0_16, %c0_17], %33 {strides = array<i32>} : memref<16x32xbf16, #tpu.memory_space<vmem>>, vector<16x32xbf16>,
    return
  }
  func.func @transform_0(%arg0: i32) -> (i32, i32) {
    %c0_i32 = arith.constant 0 : i32
    %c0_i32_0 = arith.constant 0 : i32
    return %arg0, %c0_i32 : i32, i32
  }
  func.func @transform_1(%arg0: i32) -> (i32, i32) {
    %c0_i32 = arith.constant 0 : i32
    %c0_i32_0 = arith.constant 0 : i32
    %c0_i32_1 = arith.constant 0 : i32
    return %c0_i32, %c0_i32_0 : i32, i32
  }
  func.func @transform_2(%arg0: i32) -> (i32, i32) {
    %c0_i32 = arith.constant 0 : i32
    %c0_i32_0 = arith.constant 0 : i32
    %c0_i32_1 = arith.constant 0 : i32
    return %c0_i32, %c0_i32_0 : i32, i32
  }
  func.func @transform_3(%arg0: i32) -> (i32, i32) {
    %c0_i32 = arith.constant 0 : i32
    %c0_i32_0 = arith.constant 0 : i32
    return %arg0, %c0_i32 : i32, i32
  }
  func.func @transform_4(%arg0: i32) -> (i32, i32) {
    %c0_i32 = arith.constant 0 : i32
    %c0_i32_0 = arith.constant 0 : i32
    %c0_i32_1 = arith.constant 0 : i32
    return %c0_i32, %c0_i32_0 : i32, i32
  }
  func.func @transform_5(%arg0: i32) -> (i32, i32) {
    %c0_i32 = arith.constant 0 : i32
    %c0_i32_0 = arith.constant 0 : i32
    %c0_i32_1 = arith.constant 0 : i32
    return %c0_i32, %c0_i32_0 : i32, i32
  }
  func.func @transform_6(%arg0: i32) -> (i32, i32) {
    %c0_i32 = arith.constant 0 : i32
    %c0_i32_0 = arith.constant 0 : i32
    return %arg0, %c0_i32 : i32, i32
  }
}

module attributes {stable_mosaic.version = 11 : i64} {
  func.func @_clf_kernel(%arg0: memref<2x32xbf16, #tpu.memory_space<vmem>>, %arg1: memref<32x16xbf16, #tpu.memory_space<vmem>>, %arg2: memref<1x16xf32, #tpu.memory_space<vmem>>, %arg3: memref<16x5xbf16, #tpu.memory_space<vmem>>, %arg4: memref<1x5xf32, #tpu.memory_space<vmem>>, %arg5: memref<2x5xf32, #tpu.memory_space<vmem>>) attributes {dimension_semantics = [], scalar_prefetch = 0 : i64, scratch_operands = 0 : i64, tpu.core_type = #tpu.core_type<tc>} {
    %c0 = arith.constant 0 : index
    %c0_0 = arith.constant 0 : index
    %0 = vector.load %arg0[%c0, %c0_0] : memref<2x32xbf16, #tpu.memory_space<vmem>>, vector<2x32xbf16>
    %c0_1 = arith.constant 0 : index
    %c0_2 = arith.constant 0 : index
    %1 = vector.load %arg1[%c0_1, %c0_2] : memref<32x16xbf16, #tpu.memory_space<vmem>>, vector<32x16xbf16>
    %cst = arith.constant dense<0.000000e+00> : vector<2x16xf32>
    %2 = tpu.matmul %0, %1, %cst {dimension_numbers = #tpu.dot_dimension_numbers<[1], [0], [0], [1], [0, 0, 1, 1], [], []>} : vector<2x32xbf16>, vector<32x16xbf16>, vector<2x16xf32> -> vector<2x16xf32>
    %c0_3 = arith.constant 0 : index
    %c0_4 = arith.constant 0 : index
    %3 = vector.load %arg2[%c0_3, %c0_4] : memref<1x16xf32, #tpu.memory_space<vmem>>, vector<1x16xf32>
    %4 = vector.broadcast %3 : vector<1x16xf32> to vector<2x16xf32>
    %5 = arith.addf %2, %4 : vector<2x16xf32>
    %cst_5 = arith.constant 0.000000e+00 : f32
    %6 = vector.broadcast %cst_5 : f32 to vector<2x16xf32>
    %7 = arith.maximumf %5, %6 : vector<2x16xf32>
    %8 = arith.truncf %7 : vector<2x16xf32> to vector<2x16xbf16>
    %c0_6 = arith.constant 0 : index
    %c0_7 = arith.constant 0 : index
    %9 = vector.load %arg3[%c0_6, %c0_7] : memref<16x5xbf16, #tpu.memory_space<vmem>>, vector<16x5xbf16>
    %cst_8 = arith.constant dense<0.000000e+00> : vector<2x5xf32>
    %10 = tpu.matmul %8, %9, %cst_8 {dimension_numbers = #tpu.dot_dimension_numbers<[1], [0], [0], [1], [0, 0, 1, 1], [], []>} : vector<2x16xbf16>, vector<16x5xbf16>, vector<2x5xf32> -> vector<2x5xf32>
    %c0_9 = arith.constant 0 : index
    %c0_10 = arith.constant 0 : index
    %11 = vector.load %arg4[%c0_9, %c0_10] : memref<1x5xf32, #tpu.memory_space<vmem>>, vector<1x5xf32>
    %12 = vector.broadcast %11 : vector<1x5xf32> to vector<2x5xf32>
    %13 = arith.addf %10, %12 : vector<2x5xf32>
    %c0_11 = arith.constant 0 : index
    %c0_12 = arith.constant 0 : index
    %14 = vector.load %arg5[%c0_11, %c0_12] : memref<2x5xf32, #tpu.memory_space<vmem>>, vector<2x5xf32>
    tpu.vector_store %arg5[%c0_11, %c0_12], %13 {strides = array<i32>} : memref<2x5xf32, #tpu.memory_space<vmem>>, vector<2x5xf32>,
    return
  }
}

</mosaic_0001>

<llo_original>
// kernel: bert_classifier_forward.13
$region0: #{bert_classifier_forward.13}
  #allocation0 [shape = 'u32[]', space=smem, size = 0x4, offset = 0x4, fixed_abs, tag = 'smem constant byte address 0x4 - core index']
  #allocation1 [shape = 'u32[144,128]{1,0:T(1,128)}', space=vmem, size = 0x12000, scoped, tag = 'internal scratch']
  %s0 = inlined_call_operand.vmem [shape: bf16[16,32], index: 0, kind: input, shape index: {}]
  %s1 = inlined_call_operand.vmem [shape: bf16[32,96], index: 1, kind: input, shape index: {}]
  %s2 = inlined_call_operand.vmem [shape: f32[1,96], index: 2, kind: input, shape index: {}]
  %s3 = inlined_call_operand.vmem [shape: bf16[16,96], index: 3, kind: output, shape index: {}]
  %s4 = sld [smem:[#allocation0]]
  $region22: #{bert_classifier_forward.13} parent=0
    _
  %s6 = ssub.s32 1, %s4
  %s7 = scalar_select 0, %s6, %s4
  // Predicated region
  $region2: #{bert_classifier_forward.13} parent=0 // pred_check
    _
  $region3: #{bert_classifier_forward.13} parent=0 // pred_check_branch
    %9 = sbr.rel (0) target = $region5
  $region4: #{bert_classifier_forward.13} parent=0 // pred_region
    _
  $region5: #{bert_classifier_forward.13} parent=0 // pred_fallthru
    _
  // Predicated region
  $region6: #{bert_classifier_forward.13} parent=0 // pred_check
    _
  $region7: #{bert_classifier_forward.13} parent=0 // pred_check_branch
    %11 = sbr.rel (0) target = $region9
  $region8: #{bert_classifier_forward.13} parent=0 // pred_region
    _
  $region9: #{bert_classifier_forward.13} parent=0 // pred_fallthru
    _
  // Predicated region
  $region10: #{bert_classifier_forward.13} parent=0 // pred_check
    _
  $region11: #{bert_classifier_forward.13} parent=0 // pred_check_branch
    %13 = sbr.rel (0) target = $region13
  $region12: #{bert_classifier_forward.13} parent=0 // pred_region
    _
  $region13: #{bert_classifier_forward.13} parent=0 // pred_fallthru
    _
  %v15 = vld [vmem:[%s0] sm:$0xf]
  %v16 = vld [vmem:[%s0 + $0x4] sm:$0xf]
  %v17 = vld [vmem:[%s1] sm:$0xf]
  %v18 = vld [vmem:[%s1 + $0x4] sm:$0xf]
  %v19 = vld [vmem:[%s1 + $0x8] sm:$0xf]
  %v20 = vld [vmem:[%s1 + $0xc] sm:$0xf]
  %v21 = vld [vmem:[%s2] sm:$0x1]
  %v23 = vlaneseq
  %v24 = vshrl.u32 %v23, 7
  %v25 = vsub.s32 0, %v24
  %v26 = vrot.slane %v21, %v25
  %v30 = vunpack.c.l.b16 %v15
  %v31 = vunpack.c.l.b16 %v16
  %v32 = vpack.c.b16 %v31, %v30
  %v37 = vunpack.c.l.b16 %v17
  %v38 = vunpack.c.l.b16 %v18
  %v39 = vunpack.c.l.b16 %v19
  %v40 = vunpack.c.l.b16 %v20
  %v41 = vpack.c.b16 %v38, %v37
  %v42 = vpack.c.b16 %v40, %v39
  %vm45 = vcmask 261120
  %v47 = vsel %vm45, %v32, 0
  %49 = vmatprep.subr.bf16.mxu0 0
  %50 = vmatpush1.bf16.msra.mxu0 %v41
  %51 = vmatprep.subr.bf16.mxu0 0
  %52 = vmatpush1.bf16.msra.mxu0 %v42
  %53 = vmatprep.subr.bf16.mxu0 0
  %54 = vmatpush1.bf16.msra.mxu0 0
  %55 = vmatprep.subr.bf16.mxu0 0
  %56 = vmatpush1.bf16.msra.mxu0 0
  %57 = vmatprep.subr.bf16.mxu0 0
  %58 = vmatpush1.bf16.msra.mxu0 0
  %59 = vmatprep.subr.bf16.mxu0 0
  %60 = vmatpush1.bf16.msra.mxu0 0
  %61 = vmatprep.subr.bf16.mxu0 0
  %62 = vmatpush1.bf16.msra.mxu0 0
  %63 = vmatprep.subr.bf16.mxu0 0
  %64 = vmatpush1.bf16.msra.mxu0 0
  %65 = vmatprep.subr.bf16.mxu0 0
  %66 = vmatpush1.bf16.msra.mxu0 0
  %67 = vmatprep.subr.bf16.mxu0 0
  %68 = vmatpush1.bf16.msra.mxu0 0
  %69 = vmatprep.subr.bf16.mxu0 0
  %70 = vmatpush1.bf16.msra.mxu0 0
  %71 = vmatprep.subr.bf16.mxu0 0
  %72 = vmatpush1.bf16.msra.mxu0 0
  %73 = vmatprep.subr.bf16.mxu0 0
  %74 = vmatpush1.bf16.msra.mxu0 0
  %75 = vmatprep.subr.bf16.mxu0 0
  %76 = vmatpush1.bf16.msra.mxu0 0
  %77 = vmatprep.subr.bf16.mxu0 0
  %78 = vmatpush1.bf16.msra.mxu0 0
  %79 = vmatprep.subr.bf16.mxu0 0
  %80 = vmatpush1.bf16.msra.mxu0 0
  %81 = vmatprep.mubr.bf16.mxu0 0
  %82 = vmatmul.mubr.bf16.gmra.mrb[0].mxu0 %v47
  %v83 = vpop.f32.mrb[0].mxu0
  %v84 = vadd.f32 %v26, %v83
  %v85 = vpop.f32.mrb[0].mxu0
  %v86 = vpop.f32.mrb[0].mxu0
  %v87 = vadd.f32 %v26, %v86
  %v88 = vpop.f32.mrb[0].mxu0
  %89 = vdwg.mxu0
  %v90 = vpack.c.bf16 %v87, %v84
  %v92 = vunpack.c.l.b16 %v90
  %v93 = vunpack.c.h.b16 %v90
  %v94 = vpack.c.b16 %v92, %v92
  %v95 = vpack.c.b16 %v93, %v93
  %vm98 = vcmask 781312
  %99 = vst.msk [vmem:[%s3] sm:$0xf] %vm98, %v94
  %100 = vst.msk [vmem:[%s3 + $0x4] sm:$0xf] %vm98, %v95
  // Predicated region
  $region14: #{bert_classifier_forward.13} parent=0 // pred_check
    _
  $region15: #{bert_classifier_forward.13} parent=0 // pred_check_branch
    %102 = sbr.rel (0) target = $region17
  $region16: #{bert_classifier_forward.13} parent=0 // pred_region
    _
  $region17: #{bert_classifier_forward.13} parent=0 // pred_fallthru
    _
  // Predicated region
  $region18: #{bert_classifier_forward.13} parent=0 // pred_check
    _
  $region19: #{bert_classifier_forward.13} parent=0 // pred_check_branch
    %104 = sbr.rel (0) target = $region21
  $region20: #{bert_classifier_forward.13} parent=0 // pred_region
    _
  $region21: #{bert_classifier_forward.13} parent=0 // pred_fallthru
    _

// kernel: bert_classifier_forward.15
$region0: #{bert_classifier_forward.15}
  #allocation0 [shape = 'u32[]', space=smem, size = 0x4, offset = 0x4, fixed_abs, tag = 'smem constant byte address 0x4 - core index']
  #allocation1 [shape = 'u32[144,128]{1,0:T(1,128)}', space=vmem, size = 0x12000, scoped, tag = 'internal scratch']
  %s0 = inlined_call_operand.vmem [shape: bf16[16,32], index: 0, kind: input, shape index: {}]
  %s1 = inlined_call_operand.vmem [shape: bf16[32,32], index: 1, kind: input, shape index: {}]
  %s2 = inlined_call_operand.vmem [shape: f32[1,32], index: 2, kind: input, shape index: {}]
  %s3 = inlined_call_operand.vmem [shape: bf16[16,32], index: 3, kind: input, shape index: {}]
  %s4 = inlined_call_operand.vmem [shape: f32[1,32], index: 4, kind: input, shape index: {}]
  %s5 = inlined_call_operand.vmem [shape: f32[1,32], index: 5, kind: input, shape index: {}]
  %s6 = inlined_call_operand.vmem [shape: bf16[16,32], index: 6, kind: output, shape index: {}]
  %s7 = sld [smem:[#allocation0]]
  $region34: #{bert_classifier_forward.15} parent=0
    _
  %s9 = ssub.s32 1, %s7
  %s10 = scalar_select 0, %s9, %s7
  // Predicated region
  $region2: #{bert_classifier_forward.15} parent=0 // pred_check
    _
  $region3: #{bert_classifier_forward.15} parent=0 // pred_check_branch
    %12 = sbr.rel (0) target = $region5
  $region4: #{bert_classifier_forward.15} parent=0 // pred_region
    _
  $region5: #{bert_classifier_forward.15} parent=0 // pred_fallthru
    _
  // Predicated region
  $region6: #{bert_classifier_forward.15} parent=0 // pred_check
    _
  $region7: #{bert_classifier_forward.15} parent=0 // pred_check_branch
    %14 = sbr.rel (0) target = $region9
  $region8: #{bert_classifier_forward.15} parent=0 // pred_region
    _
  $region9: #{bert_classifier_forward.15} parent=0 // pred_fallthru
    _
  // Predicated region
  $region10: #{bert_classifier_forward.15} parent=0 // pred_check
    _
  $region11: #{bert_classifier_forward.15} parent=0 // pred_check_branch
    %16 = sbr.rel (0) target = $region13
  $region12: #{bert_classifier_forward.15} parent=0 // pred_region
    _
  $region13: #{bert_classifier_forward.15} parent=0 // pred_fallthru
    _
  // Predicated region
  $region14: #{bert_classifier_forward.15} parent=0 // pred_check
    _
  $region15: #{bert_classifier_forward.15} parent=0 // pred_check_branch
    %18 = sbr.rel (0) target = $region17
  $region16: #{bert_classifier_forward.15} parent=0 // pred_region
    _
  $region17: #{bert_classifier_forward.15} parent=0 // pred_fallthru
    _
  // Predicated region
  $region18: #{bert_classifier_forward.15} parent=0 // pred_check
    _
  $region19: #{bert_classifier_forward.15} parent=0 // pred_check_branch
    %20 = sbr.rel (0) target = $region21
  $region20: #{bert_classifier_forward.15} parent=0 // pred_region
    _
  $region21: #{bert_classifier_forward.15} parent=0 // pred_fallthru
    _
  // Predicated region
  $region22: #{bert_classifier_forward.15} parent=0 // pred_check
    _
  $region23: #{bert_classifier_forward.15} parent=0 // pred_check_branch
    %22 = sbr.rel (0) target = $region25
  $region24: #{bert_classifier_forward.15} parent=0 // pred_region
    _
  $region25: #{bert_classifier_forward.15} parent=0 // pred_fallthru
    _
  %v24 = vld [vmem:[%s0] sm:$0xf]
  %v25 = vld [vmem:[%s0 + $0x4] sm:$0xf]
  %v26 = vld [vmem:[%s1] sm:$0xf]
  %v27 = vld [vmem:[%s1 + $0x4] sm:$0xf]
  %v28 = vld [vmem:[%s1 + $0x8] sm:$0xf]
  %v29 = vld [vmem:[%s1 + $0xc] sm:$0xf]
  %v30 = vld [vmem:[%s2] sm:$0x1]
  %v32 = vlaneseq
  %v33 = vshrl.u32 %v32, 7
  %v34 = vsub.s32 0, %v33
  %v35 = vrot.slane %v30, %v34
  %v39 = vunpack.c.l.b16 %v24
  %v40 = vunpack.c.l.b16 %v25
  %v41 = vpack.c.b16 %v40, %v39
  %v46 = vunpack.c.l.b16 %v26
  %v47 = vunpack.c.l.b16 %v27
  %v48 = vunpack.c.l.b16 %v28
  %v49 = vunpack.c.l.b16 %v29
  %v50 = vpack.c.b16 %v47, %v46
  %v51 = vpack.c.b16 %v49, %v48
  %vm54 = vcmask 261120
  %v56 = vsel %vm54, %v41, 0
  %58 = vmatprep.subr.bf16.mxu0 0
  %59 = vmatpush1.bf16.msra.mxu0 %v50
  %60 = vmatprep.subr.bf16.mxu0 0
  %61 = vmatpush1.bf16.msra.mxu0 %v51
  %62 = vmatprep.subr.bf16.mxu0 0
  %63 = vmatpush1.bf16.msra.mxu0 0
  %64 = vmatprep.subr.bf16.mxu0 0
  %65 = vmatpush1.bf16.msra.mxu0 0
  %66 = vmatprep.subr.bf16.mxu0 0
  %67 = vmatpush1.bf16.msra.mxu0 0
  %68 = vmatprep.subr.bf16.mxu0 0
  %69 = vmatpush1.bf16.msra.mxu0 0
  %70 = vmatprep.subr.bf16.mxu0 0
  %71 = vmatpush1.bf16.msra.mxu0 0
  %72 = vmatprep.subr.bf16.mxu0 0
  %73 = vmatpush1.bf16.msra.mxu0 0
  %74 = vmatprep.subr.bf16.mxu0 0
  %75 = vmatpush1.bf16.msra.mxu0 0
  %76 = vmatprep.subr.bf16.mxu0 0
  %77 = vmatpush1.bf16.msra.mxu0 0
  %78 = vmatprep.subr.bf16.mxu0 0
  %79 = vmatpush1.bf16.msra.mxu0 0
  %80 = vmatprep.subr.bf16.mxu0 0
  %81 = vmatpush1.bf16.msra.mxu0 0
  %82 = vmatprep.subr.bf16.mxu0 0
  %83 = vmatpush1.bf16.msra.mxu0 0
  %84 = vmatprep.subr.bf16.mxu0 0
  %85 = vmatpush1.bf16.msra.mxu0 0
  %86 = vmatprep.subr.bf16.mxu0 0
  %87 = vmatpush1.bf16.msra.mxu0 0
  %88 = vmatprep.subr.bf16.mxu0 0
  %89 = vmatpush1.bf16.msra.mxu0 0
  %90 = vmatprep.mubr.bf16.mxu0 0
  %91 = vmatmul.mubr.bf16.gmra.mrb[0].mxu0 %v56
  %v92 = vpop.f32.mrb[0].mxu0
  %v93 = vadd.f32 %v35, %v92
  %v94 = vpop.f32.mrb[0].mxu0
  %v95 = vpop.f32.mrb[0].mxu0
  %v96 = vadd.f32 %v35, %v95
  %v97 = vpop.f32.mrb[0].mxu0
  %98 = vdwg.mxu0
  %v99 = vld [vmem:[%s3] sm:$0xf]
  %v100 = vld [vmem:[%s3 + $0x4] sm:$0xf]
  %v101 = vunpack.c.l.bf16 %v99
  %v102 = vunpack.c.l.bf16 %v100
  %v103 = vadd.f32 %v93, %v101
  %v104 = vadd.f32 %v96, %v102
  %v105 = vld [vmem:[%s4] sm:$0x1]
  %v106 = vld [vmem:[%s5] sm:$0x1]
  %v107 = vsel %vm54, %v103, 0.0
  %108 = vadd.xlane.f32.xlu0 %v107
  %v109 = vpop.xlane.xlu0 %108
  %v110 = vsel %vm54, %v104, 0.0
  %111 = vadd.xlane.f32.xlu0 %v110
  %v112 = vpop.xlane.xlu0 %111
  %v113 = vrcp.pop 32.0
  %v114 = vmul.f32 %v109, %v113
  %v115 = vmul.f32 %v112, %v113
  %v116 = vsub.f32 %v103, %v114
  %v117 = vsub.f32 %v104, %v115
  %v118 = vmul.f32 %v116, %v116
  %v119 = vmul.f32 %v117, %v117
  %v120 = vsel %vm54, %v118, 0.0
  %121 = vadd.xlane.f32.xlu0 %v120
  %v122 = vpop.xlane.xlu0 %121
  %v123 = vsel %vm54, %v119, 0.0
  %124 = vadd.xlane.f32.xlu0 %v123
  %v125 = vpop.xlane.xlu0 %124
  %v126 = vmul.f32 %v122, %v113
  %v127 = vmul.f32 %v125, %v113
  %v128 = vadd.f32 %v126, 1e-12
  %v129 = vadd.f32 %v127, 1e-12
  %v130 = vrsqrt.pop %v128
  %v131 = vrsqrt.pop %v129
  %v132 = vmul.f32 %v116, %v130
  %v133 = vmul.f32 %v117, %v131
  %v135 = vlaneseq
  %v136 = vshrl.u32 %v135, 7
  %v137 = vsub.s32 0, %v136
  %v138 = vrot.slane %v105, %v137
  %v140 = vmul.f32 %v132, %v138
  %v141 = vmul.f32 %v133, %v138
  %v143 = vlaneseq
  %v144 = vshrl.u32 %v143, 7
  %v145 = vsub.s32 0, %v144
  %v146 = vrot.slane %v106, %v145
  %v148 = vadd.f32 %v140, %v146
  %v149 = vadd.f32 %v141, %v146
  %v150 = vpack.c.bf16 %v149, %v148
  %v152 = vunpack.c.l.b16 %v150
  %v153 = vunpack.c.h.b16 %v150
  %v154 = vpack.c.b16 %v152, %v152
  %v155 = vpack.c.b16 %v153, %v153
  %vm158 = vcmask 257024
  %159 = vst.msk [vmem:[%s6] sm:$0xf] %vm158, %v154
  %160 = vst.msk [vmem:[%s6 + $0x4] sm:$0xf] %vm158, %v155
  // Predicated region
  $region26: #{bert_classifier_forward.15} parent=0 // pred_check
    _
  $region27: #{bert_classifier_forward.15} parent=0 // pred_check_branch
    %162 = sbr.rel (0) target = $region29
  $region28: #{bert_classifier_forward.15} parent=0 // pred_region
    _
  $region29: #{bert_classifier_forward.15} parent=0 // pred_fallthru
    _
  // Predicated region
  $region30: #{bert_classifier_forward.15} parent=0 // pred_check
    _
  $region31: #{bert_classifier_forward.15} parent=0 // pred_check_branch
    %164 = sbr.rel (0) target = $region33
  $region32: #{bert_classifier_forward.15} parent=0 // pred_region
    _
  $region33: #{bert_classifier_forward.15} parent=0 // pred_fallthru
    _

// kernel: bert_classifier_forward.12
$region0: #{bert_classifier_forward.12}
  #allocation0 [shape = 'u32[]', space=smem, size = 0x4, offset = 0x4, fixed_abs, tag = 'smem constant byte address 0x4 - core index']
  #allocation1 [shape = 'u32[144,128]{1,0:T(1,128)}', space=vmem, size = 0x12000, scoped, tag = 'internal scratch']
  %s0 = inlined_call_operand.vmem [shape: f32[2,8,32], index: 0, kind: input, shape index: {}]
  %s1 = inlined_call_operand.vmem [shape: f32[8,32], index: 1, kind: input, shape index: {}]
  %s2 = inlined_call_operand.vmem [shape: f32[1,32], index: 2, kind: input, shape index: {}]
  %s3 = inlined_call_operand.vmem [shape: f32[1,32], index: 3, kind: input, shape index: {}]
  %s4 = inlined_call_operand.vmem [shape: f32[1,32], index: 4, kind: input, shape index: {}]
  %s5 = inlined_call_operand.vmem [shape: bf16[2,8,32], index: 5, kind: output, shape index: {}]
  %s6 = sld [smem:[#allocation0]]
  $region53: #{bert_classifier_forward.12} parent=0
    _
  %s8 = ssub.s32 1, %s6
  %s9 = scalar_select 0, %s8, %s6
  loop: start=0, step=1, limit=4
  $region2: #{bert_classifier_forward.12} parent=0 // loop_pre_header
    _
  $region3: #{bert_classifier_forward.12} parent=0 // loop_header
    %s11 = sphi 0, %s15
    %p12 = scmp.ge.s32.totalorder %s11, 4
    %s21 = sphi 0, %s23
    %s24 = sphi 0, %s21
    %s25 = sphi 0, %s24
    %s41 = sphi 0, %s25
    %s45 = sphi 0, %s45
    %s47 = sphi 0, %s45
    %s48 = sphi 0, %s47
    %s62 = sphi 0, %s48
    %s66 = sphi 0, %s66
    %s68 = sphi 0, %s66
    %s69 = sphi 0, %s68
    %s83 = sphi 0, %s69
    %s87 = sphi 0, %s87
    %s89 = sphi 0, %s87
    %s90 = sphi 0, %s89
    %s104 = sphi 0, %s90
    %s108 = sphi 0, %s108
    %s110 = sphi 0, %s108
    %s111 = sphi 0, %s110
    %s125 = sphi 0, %s111
    %s131 = sphi 0, %s133
    %s134 = sphi 0, %s131
    %s135 = sphi 0, %s134
    %s151 = sphi 0, %s135
  $region4: #{bert_classifier_forward.12} parent=0 // loop_header_branch
    %14 = sbr.rel (%p12) target = $region8
  $region5: #{bert_classifier_forward.12} parent=0 // loop_body
    %s16 = ssub.s32 %s11, 1
    %s17 = ssub.s32 %s11, 2
    %s18 = sadd.s32 %s11, 1
    %s19 = ssub.s32 %s11, %s18
    %p20 = scmp.eq.s32.totalorder %s19, 0
    %s22 = sadd.s32 %s21, 1
    %s23 = scalar_select %p20, %s21, %s22
    %p26 = pneg %p20
    %p27 = scmp.eq.s32.totalorder %s11, 1
    %p28 = por %p26, %p27
    %p29 = scmp.ne.s32.totalorder %s21, %s24
    %p30 = scmp.eq.s32.totalorder %s11, 0
    %p31 = por %p29, %p30
    %p32 = scmp.ne.s32.totalorder %s21, %s24
    %p33 = scmp.eq.s32.totalorder %s16, 1
    %p34 = por %p32, %p33
    %p35 = scmp.ne.s32.totalorder %s24, %s25
    %p36 = scmp.eq.s32.totalorder %s16, 0
    %p37 = por %p35, %p36
    %p38 = scmp.ne.s32.totalorder %s24, %s25
    %p39 = scmp.eq.s32.totalorder %s17, 1
    %p40 = por %p38, %p39
    %p42 = scmp.ne.s32.totalorder %s25, %s41
    %p43 = scmp.eq.s32.totalorder %s17, 0
    %p44 = por %p42, %p43
    %s46 = sadd.s32 %s45, 1
    %p49 = scmp.eq.s32.totalorder %s11, 1
    %p50 = scmp.ne.s32.totalorder %s45, %s47
    %p51 = scmp.eq.s32.totalorder %s11, 0
    %p52 = por %p50, %p51
    %p53 = scmp.ne.s32.totalorder %s45, %s47
    %p54 = scmp.eq.s32.totalorder %s16, 1
    %p55 = por %p53, %p54
    %p56 = scmp.ne.s32.totalorder %s47, %s48
    %p57 = scmp.eq.s32.totalorder %s16, 0
    %p58 = por %p56, %p57
    %p59 = scmp.ne.s32.totalorder %s47, %s48
    %p60 = scmp.eq.s32.totalorder %s17, 1
    %p61 = por %p59, %p60
    %p63 = scmp.ne.s32.totalorder %s48, %s62
    %p64 = scmp.eq.s32.totalorder %s17, 0
    %p65 = por %p63, %p64
    %s67 = sadd.s32 %s66, 1
    %p70 = scmp.eq.s32.totalorder %s11, 1
    %p71 = scmp.ne.s32.totalorder %s66, %s68
    %p72 = scmp.eq.s32.totalorder %s11, 0
    %p73 = por %p71, %p72
    %p74 = scmp.ne.s32.totalorder %s66, %s68
    %p75 = scmp.eq.s32.totalorder %s16, 1
    %p76 = por %p74, %p75
    %p77 = scmp.ne.s32.totalorder %s68, %s69
    %p78 = scmp.eq.s32.totalorder %s16, 0
    %p79 = por %p77, %p78
    %p80 = scmp.ne.s32.totalorder %s68, %s69
    %p81 = scmp.eq.s32.totalorder %s17, 1
    %p82 = por %p80, %p81
    %p84 = scmp.ne.s32.totalorder %s69, %s83
    %p85 = scmp.eq.s32.totalorder %s17, 0
    %p86 = por %p84, %p85
    %s88 = sadd.s32 %s87, 1
    %p91 = scmp.eq.s32.totalorder %s11, 1
    %p92 = scmp.ne.s32.totalorder %s87, %s89
    %p93 = scmp.eq.s32.totalorder %s11, 0
    %p94 = por %p92, %p93
    %p95 = scmp.ne.s32.totalorder %s87, %s89
    %p96 = scmp.eq.s32.totalorder %s16, 1
    %p97 = por %p95, %p96
    %p98 = scmp.ne.s32.totalorder %s89, %s90
    %p99 = scmp.eq.s32.totalorder %s16, 0
    %p100 = por %p98, %p99
    %p101 = scmp.ne.s32.totalorder %s89, %s90
    %p102 = scmp.eq.s32.totalorder %s17, 1
    %p103 = por %p101, %p102
    %p105 = scmp.ne.s32.totalorder %s90, %s104
    %p106 = scmp.eq.s32.totalorder %s17, 0
    %p107 = por %p105, %p106
    %s109 = sadd.s32 %s108, 1
    %p112 = scmp.eq.s32.totalorder %s11, 1
    %p113 = scmp.ne.s32.totalorder %s108, %s110
    %p114 = scmp.eq.s32.totalorder %s11, 0
    %p115 = por %p113, %p114
    %p116 = scmp.ne.s32.totalorder %s108, %s110
    %p117 = scmp.eq.s32.totalorder %s16, 1
    %p118 = por %p116, %p117
    %p119 = scmp.ne.s32.totalorder %s110, %s111
    %p120 = scmp.eq.s32.totalorder %s16, 0
    %p121 = por %p119, %p120
    %p122 = scmp.ne.s32.totalorder %s110, %s111
    %p123 = scmp.eq.s32.totalorder %s17, 1
    %p124 = por %p122, %p123
    %p126 = scmp.ne.s32.totalorder %s111, %s125
    %p127 = scmp.eq.s32.totalorder %s17, 0
    %p128 = por %p126, %p127
    %s129 = ssub.s32 %s11, %s18
    %p130 = scmp.eq.s32.totalorder %s129, 0
    %s132 = sadd.s32 %s131, 1
    %s133 = scalar_select %p130, %s131, %s132
    %p136 = pneg %p130
    %p137 = scmp.eq.s32.totalorder %s11, 1
    %p138 = por %p136, %p137
    %p139 = scmp.ne.s32.totalorder %s131, %s134
    %p140 = scmp.eq.s32.totalorder %s11, 0
    %p141 = por %p139, %p140
    %p142 = scmp.ne.s32.totalorder %s131, %s134
    %p143 = scmp.eq.s32.totalorder %s16, 1
    %p144 = por %p142, %p143
    %p145 = scmp.ne.s32.totalorder %s134, %s135
    %p146 = scmp.eq.s32.totalorder %s16, 0
    %p147 = por %p145, %p146
    %p148 = scmp.ne.s32.totalorder %s134, %s135
    %p149 = scmp.eq.s32.totalorder %s17, 1
    %p150 = por %p148, %p149
    %p152 = scmp.ne.s32.totalorder %s135, %s151
    %p153 = scmp.eq.s32.totalorder %s17, 0
    %p154 = por %p152, %p153
    %p155 = scmp.le.s32.totalorder 1, %s11
    %p156 = scmp.lt.s32.totalorder %s11, 3
    %p157 = pnand %p155, %p156
    %p158 = pneg %p157
    // Predicated region
    $region9: #{bert_classifier_forward.12} parent=5 // pred_check
      _
    $region10: #{bert_classifier_forward.12} parent=5 // pred_check_branch
      %160 = sbr.rel (%p157) target = $region12
    $region11: #{bert_classifier_forward.12} parent=5 // pred_region
      %s161 = ssub.s32 %s11, 1
      // Predicated region
      $region13: #{bert_classifier_forward.12} parent=11 // pred_check
        %p162 = pneg %p58
      $region14: #{bert_classifier_forward.12} parent=11 // pred_check_branch
        %164 = sbr.rel (%p162) target = $region16
      $region15: #{bert_classifier_forward.12} parent=11 // pred_region
        _
      $region16: #{bert_classifier_forward.12} parent=11 // pred_fallthru
        _
      // Predicated region
      $region17: #{bert_classifier_forward.12} parent=11 // pred_check
        %p165 = pneg %p79
      $region18: #{bert_classifier_forward.12} parent=11 // pred_check_branch
        %167 = sbr.rel (%p165) target = $region20
      $region19: #{bert_classifier_forward.12} parent=11 // pred_region
        _
      $region20: #{bert_classifier_forward.12} parent=11 // pred_fallthru
        _
      // Predicated region
      $region21: #{bert_classifier_forward.12} parent=11 // pred_check
        %p168 = pneg %p100
      $region22: #{bert_classifier_forward.12} parent=11 // pred_check_branch
        %170 = sbr.rel (%p168) target = $region24
      $region23: #{bert_classifier_forward.12} parent=11 // pred_region
        _
      $region24: #{bert_classifier_forward.12} parent=11 // pred_fallthru
        _
      // Predicated region
      $region25: #{bert_classifier_forward.12} parent=11 // pred_check
        %p171 = pneg %p121
      $region26: #{bert_classifier_forward.12} parent=11 // pred_check_branch
        %173 = sbr.rel (%p171) target = $region28
      $region27: #{bert_classifier_forward.12} parent=11 // pred_region
        _
      $region28: #{bert_classifier_forward.12} parent=11 // pred_fallthru
        _
    $region12: #{bert_classifier_forward.12} parent=5 // pred_fallthru
      _
    %p174 = scmp.lt.s32.totalorder %s11, 2
    // Predicated region
    $region29: #{bert_classifier_forward.12} parent=5 // pred_check
      %p175 = pneg %p174
    $region30: #{bert_classifier_forward.12} parent=5 // pred_check_branch
      %177 = sbr.rel (%p175) target = $region32
    $region31: #{bert_classifier_forward.12} parent=5 // pred_region
      // Predicated region
      $region33: #{bert_classifier_forward.12} parent=31 // pred_check
        %p178 = pneg %p31
      $region34: #{bert_classifier_forward.12} parent=31 // pred_check_branch
        %180 = sbr.rel (%p178) target = $region36
      $region35: #{bert_classifier_forward.12} parent=31 // pred_region
        %p181 = scmp.lt.s32.totalorder %s11, 1
        %s182 = scalar_select %p181, %s11, 1
        %s183 = smul.addr %s182, 8
        %s184 = scalar_lea.vmem %s0, %s183
      $region36: #{bert_classifier_forward.12} parent=31 // pred_fallthru
        _
    $region32: #{bert_classifier_forward.12} parent=5 // pred_fallthru
      _
    %p185 = scmp.le.s32.totalorder 1, %s11
    %p186 = scmp.lt.s32.totalorder %s11, 3
    %p187 = pnand %p185, %p186
    %p188 = pneg %p187
    // Predicated region
    $region37: #{bert_classifier_forward.12} parent=5 // pred_check
      _
    $region38: #{bert_classifier_forward.12} parent=5 // pred_check_branch
      %190 = sbr.rel (%p187) target = $region40
    $region39: #{bert_classifier_forward.12} parent=5 // pred_region
      %s191 = ssub.s32 %s11, 1
      %p192 = scmp.lt.s32.totalorder %s16, 1
      %s193 = scalar_select %p192, %s16, 1
      %s194 = smul.addr %s193, 8
      %s195 = scalar_lea.vmem %s0, %s194
      %p196 = pneg %p37
      %p197 = pneg %p34
      %p198 = pneg %p58
      %p199 = pneg %p55
      %p200 = pneg %p79
      %p201 = pneg %p76
      %p202 = pneg %p100
      %p203 = pneg %p97
      %p204 = pneg %p121
      %p205 = pneg %p118
      %p206 = pneg %p147
      %p207 = pneg %p144
      %p208 = scmp.lt.s32.totalorder %s16, 1
      %s209 = scalar_select %p208, %s16, 1
      %s210 = smul.addr %s209, 4
      %s211 = scalar_lea.vmem %s5, %s210
      %p212 = scmp.lt.s32.totalorder %s16, 1
      %s213 = scalar_select %p212, %s16, 1
      %s214 = smul.addr %s213, 8
      %s215 = scalar_lea.vmem %s0, %s214
      %p216 = scmp.lt.s32.totalorder %s16, 1
      %s217 = scalar_select %p216, %s16, 1
      %s218 = smul.addr %s217, 4
      %s219 = scalar_lea.vmem %s5, %s218
      %v220 = vld [vmem:[%s215] sm:$0xff]
      %v221 = vld [vmem:[%s1] sm:$0xff]
      %v222 = vadd.f32 %v220, %v221
      %v223 = vld [vmem:[%s2] sm:$0x1]
      %v225 = vlaneseq
      %v226 = vshrl.u32 %v225, 7
      %v227 = vsub.s32 0, %v226
      %v228 = vrot.slane %v223, %v227
      %v230 = vadd.f32 %v222, %v228
      %v231 = vld [vmem:[%s3] sm:$0x1]
      %v232 = vld [vmem:[%s4] sm:$0x1]
      %vm233 = vcmask 261120
      %v234 = vsel %vm233, %v230, 0.0
      %235 = vadd.xlane.f32.xlu0 %v234
      %v236 = vpop.xlane.xlu0 %235
      %v237 = vrcp.pop 32.0
      %v238 = vmul.f32 %v236, %v237
      %v239 = vsub.f32 %v230, %v238
      %v240 = vmul.f32 %v239, %v239
      %v241 = vsel %vm233, %v240, 0.0
      %242 = vadd.xlane.f32.xlu0 %v241
      %v243 = vpop.xlane.xlu0 %242
      %v244 = vmul.f32 %v243, %v237
      %v245 = vadd.f32 %v244, 1e-12
      %v246 = vrsqrt.pop %v245
      %v247 = vmul.f32 %v239, %v246
      %v249 = vlaneseq
      %v250 = vshrl.u32 %v249, 7
      %v251 = vsub.s32 0, %v250
      %v252 = vrot.slane %v231, %v251
      %v254 = vmul.f32 %v247, %v252
      %v256 = vlaneseq
      %v257 = vshrl.u32 %v256, 7
      %v258 = vsub.s32 0, %v257
      %v259 = vrot.slane %v232, %v258
      %v261 = vadd.f32 %v254, %v259
      %v262 = vpack.c.bf16 %v261, %v261
      %vm263 = vcmask 257024
      %264 = vst.msk [vmem:[%s219] sm:$0xf] %vm263, %v262
      %p265 = scmp.lt.s32.totalorder %s16, 1
      %s266 = scalar_select %p265, %s16, 1
      %s267 = smul.addr %s266, 4
      %s268 = scalar_lea.vmem %s5, %s267
      // Predicated region
      $region41: #{bert_classifier_forward.12} parent=39 // pred_check
        %p269 = pneg %p144
      $region42: #{bert_classifier_forward.12} parent=39 // pred_check_branch
        %271 = sbr.rel (%p269) target = $region44
      $region43: #{bert_classifier_forward.12} parent=39 // pred_region
        _
      $region44: #{bert_classifier_forward.12} parent=39 // pred_fallthru
        _
    $region40: #{bert_classifier_forward.12} parent=5 // pred_fallthru
      _
    %p272 = scmp.le.s32.totalorder 2, %s11
    // Predicated region
    $region45: #{bert_classifier_forward.12} parent=5 // pred_check
      %p273 = pneg %p272
    $region46: #{bert_classifier_forward.12} parent=5 // pred_check_branch
      %275 = sbr.rel (%p273) target = $region48
    $region47: #{bert_classifier_forward.12} parent=5 // pred_region
      %s276 = ssub.s32 %s11, 2
      // Predicated region
      $region49: #{bert_classifier_forward.12} parent=47 // pred_check
        %p277 = pneg %p150
      $region50: #{bert_classifier_forward.12} parent=47 // pred_check_branch
        %279 = sbr.rel (%p277) target = $region52
      $region51: #{bert_classifier_forward.12} parent=47 // pred_region
        %p280 = scmp.lt.s32.totalorder %s17, 1
        %s281 = scalar_select %p280, %s17, 1
        %s282 = smul.addr %s281, 4
        %s283 = scalar_lea.vmem %s5, %s282
      $region52: #{bert_classifier_forward.12} parent=47 // pred_fallthru
        _
    $region48: #{bert_classifier_forward.12} parent=5 // pred_fallthru
      _
  $region6: #{bert_classifier_forward.12} parent=0 // loop_footer
    %s15 = sadd.s32 1, %s11
  $region7: #{bert_classifier_forward.12} parent=0 // loop_footer_branch
    %10 = sbr.rel target = $region3
  $region8: #{bert_classifier_forward.12} parent=0 // loop_exit
    _

// kernel: bert_classifier_forward.14
$region0: #{bert_classifier_forward.14}
  #allocation0 [shape = 'u32[]', space=smem, size = 0x4, offset = 0x4, fixed_abs, tag = 'smem constant byte address 0x4 - core index']
  #allocation1 [shape = 'u32[144,128]{1,0:T(1,128)}', space=vmem, size = 0x12000, scoped, tag = 'internal scratch']
  %s0 = inlined_call_operand.vmem [shape: bf16[2,8,96], index: 0, kind: input, shape index: {}]
  %s1 = inlined_call_operand.vmem [shape: f32[2,1,8], index: 1, kind: input, shape index: {}]
  %s2 = inlined_call_operand.vmem [shape: bf16[2,8,32], index: 2, kind: output, shape index: {}]
  %s3 = sld [smem:[#allocation0]]
  $region41: #{bert_classifier_forward.14} parent=0
    _
  %s5 = ssub.s32 1, %s3
  %s6 = scalar_select 0, %s5, %s3
  loop: start=0, step=1, limit=4
  $region2: #{bert_classifier_forward.14} parent=0 // loop_pre_header
    _
  $region3: #{bert_classifier_forward.14} parent=0 // loop_header
    %s8 = sphi 0, %s12
    %p9 = scmp.ge.s32.totalorder %s8, 4
    %s18 = sphi 0, %s20
    %s21 = sphi 0, %s18
    %s22 = sphi 0, %s21
    %s38 = sphi 0, %s22
    %s44 = sphi 0, %s46
    %s47 = sphi 0, %s44
    %s48 = sphi 0, %s47
    %s64 = sphi 0, %s48
    %s70 = sphi 0, %s72
    %s73 = sphi 0, %s70
    %s74 = sphi 0, %s73
    %s90 = sphi 0, %s74
  $region4: #{bert_classifier_forward.14} parent=0 // loop_header_branch
    %11 = sbr.rel (%p9) target = $region8
  $region5: #{bert_classifier_forward.14} parent=0 // loop_body
    %s13 = ssub.s32 %s8, 1
    %s14 = ssub.s32 %s8, 2
    %s15 = sadd.s32 %s8, 1
    %s16 = ssub.s32 %s8, %s15
    %p17 = scmp.eq.s32.totalorder %s16, 0
    %s19 = sadd.s32 %s18, 1
    %s20 = scalar_select %p17, %s18, %s19
    %p23 = pneg %p17
    %p24 = scmp.eq.s32.totalorder %s8, 1
    %p25 = por %p23, %p24
    %p26 = scmp.ne.s32.totalorder %s18, %s21
    %p27 = scmp.eq.s32.totalorder %s8, 0
    %p28 = por %p26, %p27
    %p29 = scmp.ne.s32.totalorder %s18, %s21
    %p30 = scmp.eq.s32.totalorder %s13, 1
    %p31 = por %p29, %p30
    %p32 = scmp.ne.s32.totalorder %s21, %s22
    %p33 = scmp.eq.s32.totalorder %s13, 0
    %p34 = por %p32, %p33
    %p35 = scmp.ne.s32.totalorder %s21, %s22
    %p36 = scmp.eq.s32.totalorder %s14, 1
    %p37 = por %p35, %p36
    %p39 = scmp.ne.s32.totalorder %s22, %s38
    %p40 = scmp.eq.s32.totalorder %s14, 0
    %p41 = por %p39, %p40
    %s42 = ssub.s32 %s8, %s15
    %p43 = scmp.eq.s32.totalorder %s42, 0
    %s45 = sadd.s32 %s44, 1
    %s46 = scalar_select %p43, %s44, %s45
    %p49 = pneg %p43
    %p50 = scmp.eq.s32.totalorder %s8, 1
    %p51 = por %p49, %p50
    %p52 = scmp.ne.s32.totalorder %s44, %s47
    %p53 = scmp.eq.s32.totalorder %s8, 0
    %p54 = por %p52, %p53
    %p55 = scmp.ne.s32.totalorder %s44, %s47
    %p56 = scmp.eq.s32.totalorder %s13, 1
    %p57 = por %p55, %p56
    %p58 = scmp.ne.s32.totalorder %s47, %s48
    %p59 = scmp.eq.s32.totalorder %s13, 0
    %p60 = por %p58, %p59
    %p61 = scmp.ne.s32.totalorder %s47, %s48
    %p62 = scmp.eq.s32.totalorder %s14, 1
    %p63 = por %p61, %p62
    %p65 = scmp.ne.s32.totalorder %s48, %s64
    %p66 = scmp.eq.s32.totalorder %s14, 0
    %p67 = por %p65, %p66
    %s68 = ssub.s32 %s8, %s15
    %p69 = scmp.eq.s32.totalorder %s68, 0
    %s71 = sadd.s32 %s70, 1
    %s72 = scalar_select %p69, %s70, %s71
    %p75 = pneg %p69
    %p76 = scmp.eq.s32.totalorder %s8, 1
    %p77 = por %p75, %p76
    %p78 = scmp.ne.s32.totalorder %s70, %s73
    %p79 = scmp.eq.s32.totalorder %s8, 0
    %p80 = por %p78, %p79
    %p81 = scmp.ne.s32.totalorder %s70, %s73
    %p82 = scmp.eq.s32.totalorder %s13, 1
    %p83 = por %p81, %p82
    %p84 = scmp.ne.s32.totalorder %s73, %s74
    %p85 = scmp.eq.s32.totalorder %s13, 0
    %p86 = por %p84, %p85
    %p87 = scmp.ne.s32.totalorder %s73, %s74
    %p88 = scmp.eq.s32.totalorder %s14, 1
    %p89 = por %p87, %p88
    %p91 = scmp.ne.s32.totalorder %s74, %s90
    %p92 = scmp.eq.s32.totalorder %s14, 0
    %p93 = por %p91, %p92
    %p94 = scmp.le.s32.totalorder 1, %s8
    %p95 = scmp.lt.s32.totalorder %s8, 3
    %p96 = pnand %p94, %p95
    %p97 = pneg %p96
    // Predicated region
    $region9: #{bert_classifier_forward.14} parent=5 // pred_check
      _
    $region10: #{bert_classifier_forward.14} parent=5 // pred_check_branch
      %99 = sbr.rel (%p96) target = $region12
    $region11: #{bert_classifier_forward.14} parent=5 // pred_region
      %s100 = ssub.s32 %s8, 1
    $region12: #{bert_classifier_forward.14} parent=5 // pred_fallthru
      _
    %p101 = scmp.lt.s32.totalorder %s8, 2
    // Predicated region
    $region13: #{bert_classifier_forward.14} parent=5 // pred_check
      %p102 = pneg %p101
    $region14: #{bert_classifier_forward.14} parent=5 // pred_check_branch
      %104 = sbr.rel (%p102) target = $region16
    $region15: #{bert_classifier_forward.14} parent=5 // pred_region
      // Predicated region
      $region17: #{bert_classifier_forward.14} parent=15 // pred_check
        %p105 = pneg %p28
      $region18: #{bert_classifier_forward.14} parent=15 // pred_check_branch
        %107 = sbr.rel (%p105) target = $region20
      $region19: #{bert_classifier_forward.14} parent=15 // pred_region
        %p108 = scmp.lt.s32.totalorder %s8, 1
        %s109 = scalar_select %p108, %s8, 1
        %s110 = smul.addr %s109, 4
        %s111 = scalar_lea.vmem %s0, %s110
      $region20: #{bert_classifier_forward.14} parent=15 // pred_fallthru
        _
      // Predicated region
      $region21: #{bert_classifier_forward.14} parent=15 // pred_check
        %p112 = pneg %p54
      $region22: #{bert_classifier_forward.14} parent=15 // pred_check_branch
        %114 = sbr.rel (%p112) target = $region24
      $region23: #{bert_classifier_forward.14} parent=15 // pred_region
        %p115 = scmp.lt.s32.totalorder %s8, 1
        %s116 = scalar_select %p115, %s8, 1
        %s117 = scalar_lea.vmem %s1, %s116
      $region24: #{bert_classifier_forward.14} parent=15 // pred_fallthru
        _
    $region16: #{bert_classifier_forward.14} parent=5 // pred_fallthru
      _
    %p118 = scmp.le.s32.totalorder 1, %s8
    %p119 = scmp.lt.s32.totalorder %s8, 3
    %p120 = pnand %p118, %p119
    %p121 = pneg %p120
    // Predicated region
    $region25: #{bert_classifier_forward.14} parent=5 // pred_check
      _
    $region26: #{bert_classifier_forward.14} parent=5 // pred_check_branch
      %123 = sbr.rel (%p120) target = $region28
    $region27: #{bert_classifier_forward.14} parent=5 // pred_region
      %s124 = ssub.s32 %s8, 1
      %p125 = scmp.lt.s32.totalorder %s13, 1
      %s126 = scalar_select %p125, %s13, 1
      %s127 = smul.addr %s126, 4
      %s128 = scalar_lea.vmem %s0, %s127
      %p129 = pneg %p34
      %p130 = pneg %p31
      %p131 = scmp.lt.s32.totalorder %s13, 1
      %s132 = scalar_select %p131, %s13, 1
      %s133 = scalar_lea.vmem %s1, %s132
      %p134 = pneg %p60
      %p135 = pneg %p57
      %p136 = pneg %p86
      %p137 = pneg %p83
      %p138 = scmp.lt.s32.totalorder %s13, 1
      %s139 = scalar_select %p138, %s13, 1
      %s140 = smul.addr %s139, 4
      %s141 = scalar_lea.vmem %s2, %s140
      %p142 = scmp.lt.s32.totalorder %s13, 1
      %s143 = scalar_select %p142, %s13, 1
      %s144 = smul.addr %s143, 4
      %s145 = scalar_lea.vmem %s0, %s144
      %p146 = scmp.lt.s32.totalorder %s13, 1
      %s147 = scalar_select %p146, %s13, 1
      %s148 = scalar_lea.vmem %s1, %s147
      %p149 = scmp.lt.s32.totalorder %s13, 1
      %s150 = scalar_select %p149, %s13, 1
      %s151 = smul.addr %s150, 4
      %s152 = scalar_lea.vmem %s2, %s151
      %v154 = vld [vmem:[%s145] sm:$0xf]
      %v155 = vld [vmem:[%s148] sm:$0x1]
      %v156 = vsub.f32 1.0, %v155
      %v157 = vmul.f32 %v156, -1e+09
      %v159 = vunpack.c.l.b16 %v154
      %v160 = vpack.c.b16 %v159, %v159
      %161 = vrot.lane.b32.xlu0 %v160, 96
      %v162 = vpop.permute.xlu0 %161
      %vm163 = vcmask 64512
      %v165 = vsel %vm163, %v154, 0
      %v168 = vsel %vm163, %v162, 0
      %170 = vmatprep.subr.bf16.mxu0 0
      %171 = vmatpush1.bf16.xpose.msra.mxu0 %v168
      %172 = vmatprep.subr.bf16.mxu0 0
      %173 = vmatpush1.bf16.xpose.msra.mxu0 0
      %174 = vmatprep.subr.bf16.mxu0 0
      %175 = vmatpush1.bf16.xpose.msra.mxu0 0
      %176 = vmatprep.subr.bf16.mxu0 0
      %177 = vmatpush1.bf16.xpose.msra.mxu0 0
      %178 = vmatprep.subr.bf16.mxu0 0
      %179 = vmatpush1.bf16.xpose.msra.mxu0 0
      %180 = vmatprep.subr.bf16.mxu0 0
      %181 = vmatpush1.bf16.xpose.msra.mxu0 0
      %182 = vmatprep.subr.bf16.mxu0 0
      %183 = vmatpush1.bf16.xpose.msra.mxu0 0
      %184 = vmatprep.subr.bf16.mxu0 0
      %185 = vmatpush1.bf16.xpose.msra.mxu0 0
      %186 = vmatprep.subr.bf16.mxu0 0
      %187 = vmatpush1.bf16.xpose.msra.mxu0 0
      %188 = vmatprep.subr.bf16.mxu0 0
      %189 = vmatpush1.bf16.xpose.msra.mxu0 0
      %190 = vmatprep.subr.bf16.mxu0 0
      %191 = vmatpush1.bf16.xpose.msra.mxu0 0
      %192 = vmatprep.subr.bf16.mxu0 0
      %193 = vmatpush1.bf16.xpose.msra.mxu0 0
      %194 = vmatprep.subr.bf16.mxu0 0
      %195 = vmatpush1.bf16.xpose.msra.mxu0 0
      %196 = vmatprep.subr.bf16.mxu0 0
      %197 = vmatpush1.bf16.xpose.msra.mxu0 0
      %198 = vmatprep.subr.bf16.mxu0 0
      %199 = vmatpush1.bf16.xpose.msra.mxu0 0
      %200 = vmatprep.subr.bf16.mxu0 0
      %201 = vmatpush1.bf16.xpose.msra.mxu0 0
      %202 = vmatprep.mubr.bf16.mxu0 0
      %203 = vmatmul.mubr.bf16.gmra.mrb[0].mxu0 %v165
      %v204 = vpop.f32.mrb[0].mxu0
      %v205 = vadd.f32 0.0, %v204
      %v206 = vpop.f32.mrb[0].mxu0
      %v207 = vpop.f32.mrb[0].mxu0
      %v208 = vpop.f32.mrb[0].mxu0
      %209 = vdwg.mxu0
      %v210 = vmul.f32 %v205, 0.35355338
      %v212 = vlaneseq
      %v213 = vshrl.u32 %v212, 7
      %v214 = vsub.s32 0, %v213
      %v215 = vrot.slane %v157, %v214
      %v217 = vadd.f32 %v210, %v215
      %v218 = vsel %vm163, %v217, -inf
      %219 = vmax.xlane.f32.xlu0 %v218
      %v220 = vpop.xlane.xlu0 %219
      %v221 = vsub.f32 %v217, %v220
      %v222 = vmul.f32 %v221, 1.442695
      %v223 = vpow.pop %v222
      %v224 = vsel %vm163, %v223, 0.0
      %225 = vadd.xlane.f32.xlu0 %v224
      %v226 = vpop.xlane.xlu0 %225
      %v227 = vrcp.pop %v226
      %v228 = vmul.f32 %v223, %v227
      %v229 = vpack.c.bf16 %v228, %v228
      %230 = vrot.lane.b32.xlu0 %v160, 64
      %v231 = vpop.permute.xlu0 %230
      %v233 = vsel %vm163, %v229, 0
      %vm235 = vcmask 1043456
      %v237 = vsel %vm235, %v231, 0
      %239 = vmatprep.subr.bf16.mxu0 0
      %240 = vmatpush1.bf16.msra.mxu0 %v237
      %241 = vmatprep.subr.bf16.mxu0 0
      %242 = vmatpush1.bf16.msra.mxu0 0
      %243 = vmatprep.subr.bf16.mxu0 0
      %244 = vmatpush1.bf16.msra.mxu0 0
      %245 = vmatprep.subr.bf16.mxu0 0
      %246 = vmatpush1.bf16.msra.mxu0 0
      %247 = vmatprep.subr.bf16.mxu0 0
      %248 = vmatpush1.bf16.msra.mxu0 0
      %249 = vmatprep.subr.bf16.mxu0 0
      %250 = vmatpush1.bf16.msra.mxu0 0
      %251 = vmatprep.subr.bf16.mxu0 0
      %252 = vmatpush1.bf16.msra.mxu0 0
      %253 = vmatprep.subr.bf16.mxu0 0
      %254 = vmatpush1.bf16.msra.mxu0 0
      %255 = vmatprep.subr.bf16.mxu0 0
      %256 = vmatpush1.bf16.msra.mxu0 0
      %257 = vmatprep.subr.bf16.mxu0 0
      %258 = vmatpush1.bf16.msra.mxu0 0
      %259 = vmatprep.subr.bf16.mxu0 0
      %260 = vmatpush1.bf16.msra.mxu0 0
      %261 = vmatprep.subr.bf16.mxu0 0
      %262 = vmatpush1.bf16.msra.mxu0 0
      %263 = vmatprep.subr.bf16.mxu0 0
      %264 = vmatpush1.bf16.msra.mxu0 0
      %265 = vmatprep.subr.bf16.mxu0 0
      %266 = vmatpush1.bf16.msra.mxu0 0
      %267 = vmatprep.subr.bf16.mxu0 0
      %268 = vmatpush1.bf16.msra.mxu0 0
      %269 = vmatprep.subr.bf16.mxu0 0
      %270 = vmatpush1.bf16.msra.mxu0 0
      %271 = vmatprep.mubr.bf16.mxu0 0
      %272 = vmatmul.mubr.bf16.gmra.mrb[0].mxu0 %v233
      %v273 = vpop.f32.mrb[0].mxu0
      %v274 = vadd.f32 0.0, %v273
      %v275 = vpop.f32.mrb[0].mxu0
      %v276 = vpop.f32.mrb[0].mxu0
      %v277 = vpop.f32.mrb[0].mxu0
      %278 = vdwg.mxu0
      %279 = vrot.lane.b32.xlu0 %v160, 120
      %v280 = vpop.permute.xlu0 %279
      %281 = vrot.lane.b32.xlu0 %v160, 88
      %v282 = vpop.permute.xlu0 %281
      %v284 = vsel %vm163, %v280, 0
      %v287 = vsel %vm163, %v282, 0
      %289 = vmatprep.subr.bf16.mxu0 0
      %290 = vmatpush1.bf16.xpose.msra.mxu0 %v287
      %291 = vmatprep.subr.bf16.mxu0 0
      %292 = vmatpush1.bf16.xpose.msra.mxu0 0
      %293 = vmatprep.subr.bf16.mxu0 0
      %294 = vmatpush1.bf16.xpose.msra.mxu0 0
      %295 = vmatprep.subr.bf16.mxu0 0
      %296 = vmatpush1.bf16.xpose.msra.mxu0 0
      %297 = vmatprep.subr.bf16.mxu0 0
      %298 = vmatpush1.bf16.xpose.msra.mxu0 0
      %299 = vmatprep.subr.bf16.mxu0 0
      %300 = vmatpush1.bf16.xpose.msra.mxu0 0
      %301 = vmatprep.subr.bf16.mxu0 0
      %302 = vmatpush1.bf16.xpose.msra.mxu0 0
      %303 = vmatprep.subr.bf16.mxu0 0
      %304 = vmatpush1.bf16.xpose.msra.mxu0 0
      %305 = vmatprep.subr.bf16.mxu0 0
      %306 = vmatpush1.bf16.xpose.msra.mxu0 0
      %307 = vmatprep.subr.bf16.mxu0 0
      %308 = vmatpush1.bf16.xpose.msra.mxu0 0
      %309 = vmatprep.subr.bf16.mxu0 0
      %310 = vmatpush1.bf16.xpose.msra.mxu0 0
      %311 = vmatprep.subr.bf16.mxu0 0
      %312 = vmatpush1.bf16.xpose.msra.mxu0 0
      %313 = vmatprep.subr.bf16.mxu0 0
      %314 = vmatpush1.bf16.xpose.msra.mxu0 0
      %315 = vmatprep.subr.bf16.mxu0 0
      %316 = vmatpush1.bf16.xpose.msra.mxu0 0
      %317 = vmatprep.subr.bf16.mxu0 0
      %318 = vmatpush1.bf16.xpose.msra.mxu0 0
      %319 = vmatprep.subr.bf16.mxu0 0
      %320 = vmatpush1.bf16.xpose.msra.mxu0 0
      %321 = vmatprep.mubr.bf16.mxu0 0
      %322 = vmatmul.mubr.bf16.gmra.mrb[0].mxu0 %v284
      %v323 = vpop.f32.mrb[0].mxu0
      %v324 = vadd.f32 0.0, %v323
      %v325 = vpop.f32.mrb[0].mxu0
      %v326 = vpop.f32.mrb[0].mxu0
      %v327 = vpop.f32.mrb[0].mxu0
      %328 = vdwg.mxu0
      %v329 = vmul.f32 %v324, 0.35355338
      %v330 = vadd.f32 %v329, %v215
      %v331 = vsel %vm163, %v330, -inf
      %332 = vmax.xlane.f32.xlu0 %v331
      %v333 = vpop.xlane.xlu0 %332
      %v334 = vsub.f32 %v330, %v333
      %v335 = vmul.f32 %v334, 1.442695
      %v336 = vpow.pop %v335
      %v337 = vsel %vm163, %v336, 0.0
      %338 = vadd.xlane.f32.xlu0 %v337
      %v339 = vpop.xlane.xlu0 %338
      %v340 = vrcp.pop %v339
      %v341 = vmul.f32 %v336, %v340
      %v342 = vpack.c.bf16 %v341, %v341
      %343 = vrot.lane.b32.xlu0 %v160, 56
      %v344 = vpop.permute.xlu0 %343
      %v346 = vsel %vm163, %v342, 0
      %v349 = vsel %vm235, %v344, 0
      %351 = vmatprep.subr.bf16.mxu0 0
      %352 = vmatpush1.bf16.msra.mxu0 %v349
      %353 = vmatprep.subr.bf16.mxu0 0
      %354 = vmatpush1.bf16.msra.mxu0 0
      %355 = vmatprep.subr.bf16.mxu0 0
      %356 = vmatpush1.bf16.msra.mxu0 0
      %357 = vmatprep.subr.bf16.mxu0 0
      %358 = vmatpush1.bf16.msra.mxu0 0
      %359 = vmatprep.subr.bf16.mxu0 0
      %360 = vmatpush1.bf16.msra.mxu0 0
      %361 = vmatprep.subr.bf16.mxu0 0
      %362 = vmatpush1.bf16.msra.mxu0 0
      %363 = vmatprep.subr.bf16.mxu0 0
      %364 = vmatpush1.bf16.msra.mxu0 0
      %365 = vmatprep.subr.bf16.mxu0 0
      %366 = vmatpush1.bf16.msra.mxu0 0
      %367 = vmatprep.subr.bf16.mxu0 0
      %368 = vmatpush1.bf16.msra.mxu0 0
      %369 = vmatprep.subr.bf16.mxu0 0
      %370 = vmatpush1.bf16.msra.mxu0 0
      %371 = vmatprep.subr.bf16.mxu0 0
      %372 = vmatpush1.bf16.msra.mxu0 0
      %373 = vmatprep.subr.bf16.mxu0 0
      %374 = vmatpush1.bf16.msra.mxu0 0
      %375 = vmatprep.subr.bf16.mxu0 0
      %376 = vmatpush1.bf16.msra.mxu0 0
      %377 = vmatprep.subr.bf16.mxu0 0
      %378 = vmatpush1.bf16.msra.mxu0 0
      %379 = vmatprep.subr.bf16.mxu0 0
      %380 = vmatpush1.bf16.msra.mxu0 0
      %381 = vmatprep.subr.bf16.mxu0 0
      %382 = vmatpush1.bf16.msra.mxu0 0
      %383 = vmatprep.mubr.bf16.mxu0 0
      %384 = vmatmul.mubr.bf16.gmra.mrb[0].mxu0 %v346
      %v385 = vpop.f32.mrb[0].mxu0
      %v386 = vadd.f32 0.0, %v385
      %v387 = vpop.f32.mrb[0].mxu0
      %v388 = vpop.f32.mrb[0].mxu0
      %v389 = vpop.f32.mrb[0].mxu0
      %390 = vdwg.mxu0
      %391 = vrot.lane.b32.xlu0 %v160, 112
      %v392 = vpop.permute.xlu0 %391
      %393 = vrot.lane.b32.xlu0 %v160, 80
      %v394 = vpop.permute.xlu0 %393
      %v396 = vsel %vm163, %v392, 0
      %v399 = vsel %vm163, %v394, 0
      %401 = vmatprep.subr.bf16.mxu0 0
      %402 = vmatpush1.bf16.xpose.msra.mxu0 %v399
      %403 = vmatprep.subr.bf16.mxu0 0
      %404 = vmatpush1.bf16.xpose.msra.mxu0 0
      %405 = vmatprep.subr.bf16.mxu0 0
      %406 = vmatpush1.bf16.xpose.msra.mxu0 0
      %407 = vmatprep.subr.bf16.mxu0 0
      %408 = vmatpush1.bf16.xpose.msra.mxu0 0
      %409 = vmatprep.subr.bf16.mxu0 0
      %410 = vmatpush1.bf16.xpose.msra.mxu0 0
      %411 = vmatprep.subr.bf16.mxu0 0
      %412 = vmatpush1.bf16.xpose.msra.mxu0 0
      %413 = vmatprep.subr.bf16.mxu0 0
      %414 = vmatpush1.bf16.xpose.msra.mxu0 0
      %415 = vmatprep.subr.bf16.mxu0 0
      %416 = vmatpush1.bf16.xpose.msra.mxu0 0
      %417 = vmatprep.subr.bf16.mxu0 0
      %418 = vmatpush1.bf16.xpose.msra.mxu0 0
      %419 = vmatprep.subr.bf16.mxu0 0
      %420 = vmatpush1.bf16.xpose.msra.mxu0 0
      %421 = vmatprep.subr.bf16.mxu0 0
      %422 = vmatpush1.bf16.xpose.msra.mxu0 0
      %423 = vmatprep.subr.bf16.mxu0 0
      %424 = vmatpush1.bf16.xpose.msra.mxu0 0
      %425 = vmatprep.subr.bf16.mxu0 0
      %426 = vmatpush1.bf16.xpose.msra.mxu0 0
      %427 = vmatprep.subr.bf16.mxu0 0
      %428 = vmatpush1.bf16.xpose.msra.mxu0 0
      %429 = vmatprep.subr.bf16.mxu0 0
      %430 = vmatpush1.bf16.xpose.msra.mxu0 0
      %431 = vmatprep.subr.bf16.mxu0 0
      %432 = vmatpush1.bf16.xpose.msra.mxu0 0
      %433 = vmatprep.mubr.bf16.mxu0 0
      %434 = vmatmul.mubr.bf16.gmra.mrb[0].mxu0 %v396
      %v435 = vpop.f32.mrb[0].mxu0
      %v436 = vadd.f32 0.0, %v435
      %v437 = vpop.f32.mrb[0].mxu0
      %v438 = vpop.f32.mrb[0].mxu0
      %v439 = vpop.f32.mrb[0].mxu0
      %440 = vdwg.mxu0
      %v441 = vmul.f32 %v436, 0.35355338
      %v442 = vadd.f32 %v441, %v215
      %v443 = vsel %vm163, %v442, -inf
      %444 = vmax.xlane.f32.xlu0 %v443
      %v445 = vpop.xlane.xlu0 %444
      %v446 = vsub.f32 %v442, %v445
      %v447 = vmul.f32 %v446, 1.442695
      %v448 = vpow.pop %v447
      %v449 = vsel %vm163, %v448, 0.0
      %450 = vadd.xlane.f32.xlu0 %v449
      %v451 = vpop.xlane.xlu0 %450
      %v452 = vrcp.pop %v451
      %v453 = vmul.f32 %v448, %v452
      %v454 = vpack.c.bf16 %v453, %v453
      %455 = vrot.lane.b32.xlu0 %v160, 48
      %v456 = vpop.permute.xlu0 %455
      %v458 = vsel %vm163, %v454, 0
      %v461 = vsel %vm235, %v456, 0
      %463 = vmatprep.subr.bf16.mxu0 0
      %464 = vmatpush1.bf16.msra.mxu0 %v461
      %465 = vmatprep.subr.bf16.mxu0 0
      %466 = vmatpush1.bf16.msra.mxu0 0
      %467 = vmatprep.subr.bf16.mxu0 0
      %468 = vmatpush1.bf16.msra.mxu0 0
      %469 = vmatprep.subr.bf16.mxu0 0
      %470 = vmatpush1.bf16.msra.mxu0 0
      %471 = vmatprep.subr.bf16.mxu0 0
      %472 = vmatpush1.bf16.msra.mxu0 0
      %473 = vmatprep.subr.bf16.mxu0 0
      %474 = vmatpush1.bf16.msra.mxu0 0
      %475 = vmatprep.subr.bf16.mxu0 0
      %476 = vmatpush1.bf16.msra.mxu0 0
      %477 = vmatprep.subr.bf16.mxu0 0
      %478 = vmatpush1.bf16.msra.mxu0 0
      %479 = vmatprep.subr.bf16.mxu0 0
      %480 = vmatpush1.bf16.msra.mxu0 0
      %481 = vmatprep.subr.bf16.mxu0 0
      %482 = vmatpush1.bf16.msra.mxu0 0
      %483 = vmatprep.subr.bf16.mxu0 0
      %484 = vmatpush1.bf16.msra.mxu0 0
      %485 = vmatprep.subr.bf16.mxu0 0
      %486 = vmatpush1.bf16.msra.mxu0 0
      %487 = vmatprep.subr.bf16.mxu0 0
      %488 = vmatpush1.bf16.msra.mxu0 0
      %489 = vmatprep.subr.bf16.mxu0 0
      %490 = vmatpush1.bf16.msra.mxu0 0
      %491 = vmatprep.subr.bf16.mxu0 0
      %492 = vmatpush1.bf16.msra.mxu0 0
      %493 = vmatprep.subr.bf16.mxu0 0
      %494 = vmatpush1.bf16.msra.mxu0 0
      %495 = vmatprep.mubr.bf16.mxu0 0
      %496 = vmatmul.mubr.bf16.gmra.mrb[0].mxu0 %v458
      %v497 = vpop.f32.mrb[0].mxu0
      %v498 = vadd.f32 0.0, %v497
      %v499 = vpop.f32.mrb[0].mxu0
      %v500 = vpop.f32.mrb[0].mxu0
      %v501 = vpop.f32.mrb[0].mxu0
      %502 = vdwg.mxu0
      %503 = vrot.lane.b32.xlu0 %v160, 104
      %v504 = vpop.permute.xlu0 %503
      %505 = vrot.lane.b32.xlu0 %v160, 72
      %v506 = vpop.permute.xlu0 %505
      %v508 = vsel %vm163, %v504, 0
      %v511 = vsel %vm163, %v506, 0
      %513 = vmatprep.subr.bf16.mxu0 0
      %514 = vmatpush1.bf16.xpose.msra.mxu0 %v511
      %515 = vmatprep.subr.bf16.mxu0 0
      %516 = vmatpush1.bf16.xpose.msra.mxu0 0
      %517 = vmatprep.subr.bf16.mxu0 0
      %518 = vmatpush1.bf16.xpose.msra.mxu0 0
      %519 = vmatprep.subr.bf16.mxu0 0
      %520 = vmatpush1.bf16.xpose.msra.mxu0 0
      %521 = vmatprep.subr.bf16.mxu0 0
      %522 = vmatpush1.bf16.xpose.msra.mxu0 0
      %523 = vmatprep.subr.bf16.mxu0 0
      %524 = vmatpush1.bf16.xpose.msra.mxu0 0
      %525 = vmatprep.subr.bf16.mxu0 0
      %526 = vmatpush1.bf16.xpose.msra.mxu0 0
      %527 = vmatprep.subr.bf16.mxu0 0
      %528 = vmatpush1.bf16.xpose.msra.mxu0 0
      %529 = vmatprep.subr.bf16.mxu0 0
      %530 = vmatpush1.bf16.xpose.msra.mxu0 0
      %531 = vmatprep.subr.bf16.mxu0 0
      %532 = vmatpush1.bf16.xpose.msra.mxu0 0
      %533 = vmatprep.subr.bf16.mxu0 0
      %534 = vmatpush1.bf16.xpose.msra.mxu0 0
      %535 = vmatprep.subr.bf16.mxu0 0
      %536 = vmatpush1.bf16.xpose.msra.mxu0 0
      %537 = vmatprep.subr.bf16.mxu0 0
      %538 = vmatpush1.bf16.xpose.msra.mxu0 0
      %539 = vmatprep.subr.bf16.mxu0 0
      %540 = vmatpush1.bf16.xpose.msra.mxu0 0
      %541 = vmatprep.subr.bf16.mxu0 0
      %542 = vmatpush1.bf16.xpose.msra.mxu0 0
      %543 = vmatprep.subr.bf16.mxu0 0
      %544 = vmatpush1.bf16.xpose.msra.mxu0 0
      %545 = vmatprep.mubr.bf16.mxu0 0
      %546 = vmatmul.mubr.bf16.gmra.mrb[0].mxu0 %v508
      %v547 = vpop.f32.mrb[0].mxu0
      %v548 = vadd.f32 0.0, %v547
      %v549 = vpop.f32.mrb[0].mxu0
      %v550 = vpop.f32.mrb[0].mxu0
      %v551 = vpop.f32.mrb[0].mxu0
      %552 = vdwg.mxu0
      %v553 = vmul.f32 %v548, 0.35355338
      %v554 = vadd.f32 %v553, %v215
      %v555 = vsel %vm163, %v554, -inf
      %556 = vmax.xlane.f32.xlu0 %v555
      %v557 = vpop.xlane.xlu0 %556
      %v558 = vsub.f32 %v554, %v557
      %v559 = vmul.f32 %v558, 1.442695
      %v560 = vpow.pop %v559
      %v561 = vsel %vm163, %v560, 0.0
      %562 = vadd.xlane.f32.xlu0 %v561
      %v563 = vpop.xlane.xlu0 %562
      %v564 = vrcp.pop %v563
      %v565 = vmul.f32 %v560, %v564
      %v566 = vpack.c.bf16 %v565, %v565
      %567 = vrot.lane.b32.xlu0 %v160, 40
      %v568 = vpop.permute.xlu0 %567
      %v570 = vsel %vm163, %v566, 0
      %v573 = vsel %vm235, %v568, 0
      %575 = vmatprep.subr.bf16.mxu0 0
      %576 = vmatpush1.bf16.msra.mxu0 %v573
      %577 = vmatprep.subr.bf16.mxu0 0
      %578 = vmatpush1.bf16.msra.mxu0 0
      %579 = vmatprep.subr.bf16.mxu0 0
      %580 = vmatpush1.bf16.msra.mxu0 0
      %581 = vmatprep.subr.bf16.mxu0 0
      %582 = vmatpush1.bf16.msra.mxu0 0
      %583 = vmatprep.subr.bf16.mxu0 0
      %584 = vmatpush1.bf16.msra.mxu0 0
      %585 = vmatprep.subr.bf16.mxu0 0
      %586 = vmatpush1.bf16.msra.mxu0 0
      %587 = vmatprep.subr.bf16.mxu0 0
      %588 = vmatpush1.bf16.msra.mxu0 0
      %589 = vmatprep.subr.bf16.mxu0 0
      %590 = vmatpush1.bf16.msra.mxu0 0
      %591 = vmatprep.subr.bf16.mxu0 0
      %592 = vmatpush1.bf16.msra.mxu0 0
      %593 = vmatprep.subr.bf16.mxu0 0
      %594 = vmatpush1.bf16.msra.mxu0 0
      %595 = vmatprep.subr.bf16.mxu0 0
      %596 = vmatpush1.bf16.msra.mxu0 0
      %597 = vmatprep.subr.bf16.mxu0 0
      %598 = vmatpush1.bf16.msra.mxu0 0
      %599 = vmatprep.subr.bf16.mxu0 0
      %600 = vmatpush1.bf16.msra.mxu0 0
      %601 = vmatprep.subr.bf16.mxu0 0
      %602 = vmatpush1.bf16.msra.mxu0 0
      %603 = vmatprep.subr.bf16.mxu0 0
      %604 = vmatpush1.bf16.msra.mxu0 0
      %605 = vmatprep.subr.bf16.mxu0 0
      %606 = vmatpush1.bf16.msra.mxu0 0
      %607 = vmatprep.mubr.bf16.mxu0 0
      %608 = vmatmul.mubr.bf16.gmra.mrb[0].mxu0 %v570
      %v609 = vpop.f32.mrb[0].mxu0
      %v610 = vadd.f32 0.0, %v609
      %v611 = vpop.f32.mrb[0].mxu0
      %v612 = vpop.f32.mrb[0].mxu0
      %v613 = vpop.f32.mrb[0].mxu0
      %614 = vdwg.mxu0
      %616 = vrot.lane.b32.xlu0 %v386, 8
      %v617 = vpop.permute.xlu0 %616
      %620 = vrot.lane.b32.xlu0 %v498, 16
      %v621 = vpop.permute.xlu0 %620
      %624 = vrot.lane.b32.xlu0 %v610, 24
      %v625 = vpop.permute.xlu0 %624
      %v627 = vsel %vm163, %v274, %v617
      %vm628 = vcmask 130048
      %v629 = vsel %vm628, %v627, %v621
      %vm630 = vcmask 195584
      %v631 = vsel %vm630, %v629, %v625
      %v632 = vpack.c.bf16 %v631, %v631
      %vm633 = vcmask 257024
      %634 = vst.msk [vmem:[%s152] sm:$0xf] %vm633, %v632
      %p635 = scmp.lt.s32.totalorder %s13, 1
      %s636 = scalar_select %p635, %s13, 1
      %s637 = smul.addr %s636, 4
      %s638 = scalar_lea.vmem %s2, %s637
      // Predicated region
      $region29: #{bert_classifier_forward.14} parent=27 // pred_check
        %p639 = pneg %p83
      $region30: #{bert_classifier_forward.14} parent=27 // pred_check_branch
        %641 = sbr.rel (%p639) target = $region32
      $region31: #{bert_classifier_forward.14} parent=27 // pred_region
        _
      $region32: #{bert_classifier_forward.14} parent=27 // pred_fallthru
        _
    $region28: #{bert_classifier_forward.14} parent=5 // pred_fallthru
      _
    %p642 = scmp.le.s32.totalorder 2, %s8
    // Predicated region
    $region33: #{bert_classifier_forward.14} parent=5 // pred_check
      %p643 = pneg %p642
    $region34: #{bert_classifier_forward.14} parent=5 // pred_check_branch
      %645 = sbr.rel (%p643) target = $region36
    $region35: #{bert_classifier_forward.14} parent=5 // pred_region
      %s646 = ssub.s32 %s8, 2
      // Predicated region
      $region37: #{bert_classifier_forward.14} parent=35 // pred_check
        %p647 = pneg %p89
      $region38: #{bert_classifier_forward.14} parent=35 // pred_check_branch
        %649 = sbr.rel (%p647) target = $region40
      $region39: #{bert_classifier_forward.14} parent=35 // pred_region
        %p650 = scmp.lt.s32.totalorder %s14, 1
        %s651 = scalar_select %p650, %s14, 1
        %s652 = smul.addr %s651, 4
        %s653 = scalar_lea.vmem %s2, %s652
      $region40: #{bert_classifier_forward.14} parent=35 // pred_fallthru
        _
    $region36: #{bert_classifier_forward.14} parent=5 // pred_fallthru
      _
  $region6: #{bert_classifier_forward.14} parent=0 // loop_footer
    %s12 = sadd.s32 1, %s8
  $region7: #{bert_classifier_forward.14} parent=0 // loop_footer_branch
    %7 = sbr.rel target = $region3
  $region8: #{bert_classifier_forward.14} parent=0 // loop_exit
    _

// kernel: bert_classifier_forward.16
$region0: #{bert_classifier_forward.16}
  #allocation0 [shape = 'u32[]', space=smem, size = 0x4, offset = 0x4, fixed_abs, tag = 'smem constant byte address 0x4 - core index']
  #allocation1 [shape = 'u32[144,128]{1,0:T(1,128)}', space=vmem, size = 0x12000, scoped, tag = 'internal scratch']
  %s0 = inlined_call_operand.vmem [shape: bf16[16,32], index: 0, kind: input, shape index: {}]
  %s1 = inlined_call_operand.vmem [shape: bf16[32,128], index: 1, kind: input, shape index: {}]
  %s2 = inlined_call_operand.vmem [shape: f32[1,128], index: 2, kind: input, shape index: {}]
  %s3 = inlined_call_operand.vmem [shape: bf16[16,128], index: 3, kind: output, shape index: {}]
  %s4 = sld [smem:[#allocation0]]
  $region22: #{bert_classifier_forward.16} parent=0
    _
  %s6 = ssub.s32 1, %s4
  %s7 = scalar_select 0, %s6, %s4
  // Predicated region
  $region2: #{bert_classifier_forward.16} parent=0 // pred_check
    _
  $region3: #{bert_classifier_forward.16} parent=0 // pred_check_branch
    %9 = sbr.rel (0) target = $region5
  $region4: #{bert_classifier_forward.16} parent=0 // pred_region
    _
  $region5: #{bert_classifier_forward.16} parent=0 // pred_fallthru
    _
  // Predicated region
  $region6: #{bert_classifier_forward.16} parent=0 // pred_check
    _
  $region7: #{bert_classifier_forward.16} parent=0 // pred_check_branch
    %11 = sbr.rel (0) target = $region9
  $region8: #{bert_classifier_forward.16} parent=0 // pred_region
    _
  $region9: #{bert_classifier_forward.16} parent=0 // pred_fallthru
    _
  // Predicated region
  $region10: #{bert_classifier_forward.16} parent=0 // pred_check
    _
  $region11: #{bert_classifier_forward.16} parent=0 // pred_check_branch
    %13 = sbr.rel (0) target = $region13
  $region12: #{bert_classifier_forward.16} parent=0 // pred_region
    _
  $region13: #{bert_classifier_forward.16} parent=0 // pred_fallthru
    _
  %v15 = vld [vmem:[%s0] sm:$0xf]
  %v16 = vld [vmem:[%s0 + $0x4] sm:$0xf]
  %v17 = vld [vmem:[%s1] sm:$0xf]
  %v18 = vld [vmem:[%s1 + $0x4] sm:$0xf]
  %v19 = vld [vmem:[%s1 + $0x8] sm:$0xf]
  %v20 = vld [vmem:[%s1 + $0xc] sm:$0xf]
  %v21 = vld [vmem:[%s2] sm:$0x1]
  %v23 = vlaneseq
  %v24 = vshrl.u32 %v23, 7
  %v25 = vsub.s32 0, %v24
  %v26 = vrot.slane %v21, %v25
  %v30 = vunpack.c.l.b16 %v15
  %v31 = vunpack.c.l.b16 %v16
  %v32 = vpack.c.b16 %v31, %v30
  %v37 = vunpack.c.l.b16 %v17
  %v38 = vunpack.c.l.b16 %v18
  %v39 = vunpack.c.l.b16 %v19
  %v40 = vunpack.c.l.b16 %v20
  %v41 = vpack.c.b16 %v38, %v37
  %v42 = vpack.c.b16 %v40, %v39
  %vm45 = vcmask 261120
  %v47 = vsel %vm45, %v32, 0
  %49 = vmatprep.subr.bf16.mxu0 0
  %50 = vmatpush1.bf16.msra.mxu0 %v41
  %51 = vmatprep.subr.bf16.mxu0 0
  %52 = vmatpush1.bf16.msra.mxu0 %v42
  %53 = vmatprep.subr.bf16.mxu0 0
  %54 = vmatpush1.bf16.msra.mxu0 0
  %55 = vmatprep.subr.bf16.mxu0 0
  %56 = vmatpush1.bf16.msra.mxu0 0
  %57 = vmatprep.subr.bf16.mxu0 0
  %58 = vmatpush1.bf16.msra.mxu0 0
  %59 = vmatprep.subr.bf16.mxu0 0
  %60 = vmatpush1.bf16.msra.mxu0 0
  %61 = vmatprep.subr.bf16.mxu0 0
  %62 = vmatpush1.bf16.msra.mxu0 0
  %63 = vmatprep.subr.bf16.mxu0 0
  %64 = vmatpush1.bf16.msra.mxu0 0
  %65 = vmatprep.subr.bf16.mxu0 0
  %66 = vmatpush1.bf16.msra.mxu0 0
  %67 = vmatprep.subr.bf16.mxu0 0
  %68 = vmatpush1.bf16.msra.mxu0 0
  %69 = vmatprep.subr.bf16.mxu0 0
  %70 = vmatpush1.bf16.msra.mxu0 0
  %71 = vmatprep.subr.bf16.mxu0 0
  %72 = vmatpush1.bf16.msra.mxu0 0
  %73 = vmatprep.subr.bf16.mxu0 0
  %74 = vmatpush1.bf16.msra.mxu0 0
  %75 = vmatprep.subr.bf16.mxu0 0
  %76 = vmatpush1.bf16.msra.mxu0 0
  %77 = vmatprep.subr.bf16.mxu0 0
  %78 = vmatpush1.bf16.msra.mxu0 0
  %79 = vmatprep.subr.bf16.mxu0 0
  %80 = vmatpush1.bf16.msra.mxu0 0
  %81 = vmatprep.mubr.bf16.mxu0 0
  %82 = vmatmul.mubr.bf16.gmra.mrb[0].mxu0 %v47
  %v83 = vpop.f32.mrb[0].mxu0
  %v84 = vadd.f32 %v26, %v83
  %v85 = vpop.f32.mrb[0].mxu0
  %v86 = vpop.f32.mrb[0].mxu0
  %v87 = vadd.f32 %v26, %v86
  %v88 = vpop.f32.mrb[0].mxu0
  %89 = vdwg.mxu0
  %v90 = vmul.f32 %v84, %v84
  %v91 = vmul.f32 %v87, %v87
  %v92 = vmul.f32 %v84, %v90
  %v93 = vmul.f32 %v87, %v91
  %v94 = vmul.f32 %v92, 0.044715
  %v95 = vmul.f32 %v93, 0.044715
  %v96 = vadd.f32 %v84, %v94
  %v97 = vadd.f32 %v87, %v95
  %v98 = vmul.f32 %v96, 0.7978846
  %v99 = vmul.f32 %v97, 0.7978846
  %v100 = vtanh.pop %v98
  %v101 = vtanh.pop %v99
  %v102 = vadd.f32 %v100, 1.0
  %v103 = vadd.f32 %v101, 1.0
  %v104 = vmul.f32 %v102, 0.5
  %v105 = vmul.f32 %v103, 0.5
  %v106 = vmul.f32 %v84, %v104
  %v107 = vmul.f32 %v87, %v105
  %v108 = vpack.c.bf16 %v107, %v106
  %v110 = vunpack.c.l.b16 %v108
  %v111 = vunpack.c.h.b16 %v108
  %v112 = vpack.c.b16 %v110, %v110
  %v113 = vpack.c.b16 %v111, %v111
  %116 = vst [vmem:[%s3] sm:$0xf] %v112
  %117 = vst [vmem:[%s3 + $0x4] sm:$0xf] %v113
  // Predicated region
  $region14: #{bert_classifier_forward.16} parent=0 // pred_check
    _
  $region15: #{bert_classifier_forward.16} parent=0 // pred_check_branch
    %119 = sbr.rel (0) target = $region17
  $region16: #{bert_classifier_forward.16} parent=0 // pred_region
    _
  $region17: #{bert_classifier_forward.16} parent=0 // pred_fallthru
    _
  // Predicated region
  $region18: #{bert_classifier_forward.16} parent=0 // pred_check
    _
  $region19: #{bert_classifier_forward.16} parent=0 // pred_check_branch
    %121 = sbr.rel (0) target = $region21
  $region20: #{bert_classifier_forward.16} parent=0 // pred_region
    _
  $region21: #{bert_classifier_forward.16} parent=0 // pred_fallthru
    _

// kernel: bert_classifier_forward.17
$region0: #{bert_classifier_forward.17}
  #allocation0 [shape = 'u32[]', space=smem, size = 0x4, offset = 0x4, fixed_abs, tag = 'smem constant byte address 0x4 - core index']
  #allocation1 [shape = 'u32[144,128]{1,0:T(1,128)}', space=vmem, size = 0x12000, scoped, tag = 'internal scratch']
  %s0 = inlined_call_operand.vmem [shape: bf16[16,128], index: 0, kind: input, shape index: {}]
  %s1 = inlined_call_operand.vmem [shape: bf16[128,32], index: 1, kind: input, shape index: {}]
  %s2 = inlined_call_operand.vmem [shape: f32[1,32], index: 2, kind: input, shape index: {}]
  %s3 = inlined_call_operand.vmem [shape: bf16[16,32], index: 3, kind: input, shape index: {}]
  %s4 = inlined_call_operand.vmem [shape: f32[1,32], index: 4, kind: input, shape index: {}]
  %s5 = inlined_call_operand.vmem [shape: f32[1,32], index: 5, kind: input, shape index: {}]
  %s6 = inlined_call_operand.vmem [shape: bf16[16,32], index: 6, kind: output, shape index: {}]
  %s7 = sld [smem:[#allocation0]]
  $region34: #{bert_classifier_forward.17} parent=0
    _
  %s9 = ssub.s32 1, %s7
  %s10 = scalar_select 0, %s9, %s7
  // Predicated region
  $region2: #{bert_classifier_forward.17} parent=0 // pred_check
    _
  $region3: #{bert_classifier_forward.17} parent=0 // pred_check_branch
    %12 = sbr.rel (0) target = $region5
  $region4: #{bert_classifier_forward.17} parent=0 // pred_region
    _
  $region5: #{bert_classifier_forward.17} parent=0 // pred_fallthru
    _
  // Predicated region
  $region6: #{bert_classifier_forward.17} parent=0 // pred_check
    _
  $region7: #{bert_classifier_forward.17} parent=0 // pred_check_branch
    %14 = sbr.rel (0) target = $region9
  $region8: #{bert_classifier_forward.17} parent=0 // pred_region
    _
  $region9: #{bert_classifier_forward.17} parent=0 // pred_fallthru
    _
  // Predicated region
  $region10: #{bert_classifier_forward.17} parent=0 // pred_check
    _
  $region11: #{bert_classifier_forward.17} parent=0 // pred_check_branch
    %16 = sbr.rel (0) target = $region13
  $region12: #{bert_classifier_forward.17} parent=0 // pred_region
    _
  $region13: #{bert_classifier_forward.17} parent=0 // pred_fallthru
    _
  // Predicated region
  $region14: #{bert_classifier_forward.17} parent=0 // pred_check
    _
  $region15: #{bert_classifier_forward.17} parent=0 // pred_check_branch
    %18 = sbr.rel (0) target = $region17
  $region16: #{bert_classifier_forward.17} parent=0 // pred_region
    _
  $region17: #{bert_classifier_forward.17} parent=0 // pred_fallthru
    _
  // Predicated region
  $region18: #{bert_classifier_forward.17} parent=0 // pred_check
    _
  $region19: #{bert_classifier_forward.17} parent=0 // pred_check_branch
    %20 = sbr.rel (0) target = $region21
  $region20: #{bert_classifier_forward.17} parent=0 // pred_region
    _
  $region21: #{bert_classifier_forward.17} parent=0 // pred_fallthru
    _
  // Predicated region
  $region22: #{bert_classifier_forward.17} parent=0 // pred_check
    _
  $region23: #{bert_classifier_forward.17} parent=0 // pred_check_branch
    %22 = sbr.rel (0) target = $region25
  $region24: #{bert_classifier_forward.17} parent=0 // pred_region
    _
  $region25: #{bert_classifier_forward.17} parent=0 // pred_fallthru
    _
  %v24 = vld [vmem:[%s0] sm:$0xf]
  %v25 = vld [vmem:[%s0 + $0x4] sm:$0xf]
  %v26 = vld [vmem:[%s1] sm:$0xf]
  %v27 = vld [vmem:[%s1 + $0x4] sm:$0xf]
  %v28 = vld [vmem:[%s1 + $0x8] sm:$0xf]
  %v29 = vld [vmem:[%s1 + $0xc] sm:$0xf]
  %v30 = vld [vmem:[%s1 + $0x10] sm:$0xf]
  %v31 = vld [vmem:[%s1 + $0x14] sm:$0xf]
  %v32 = vld [vmem:[%s1 + $0x18] sm:$0xf]
  %v33 = vld [vmem:[%s1 + $0x1c] sm:$0xf]
  %v34 = vld [vmem:[%s1 + $0x20] sm:$0xf]
  %v35 = vld [vmem:[%s1 + $0x24] sm:$0xf]
  %v36 = vld [vmem:[%s1 + $0x28] sm:$0xf]
  %v37 = vld [vmem:[%s1 + $0x2c] sm:$0xf]
  %v38 = vld [vmem:[%s1 + $0x30] sm:$0xf]
  %v39 = vld [vmem:[%s1 + $0x34] sm:$0xf]
  %v40 = vld [vmem:[%s1 + $0x38] sm:$0xf]
  %v41 = vld [vmem:[%s1 + $0x3c] sm:$0xf]
  %v42 = vld [vmem:[%s2] sm:$0x1]
  %v44 = vlaneseq
  %v45 = vshrl.u32 %v44, 7
  %v46 = vsub.s32 0, %v45
  %v47 = vrot.slane %v42, %v46
  %v51 = vunpack.c.l.b16 %v24
  %v52 = vunpack.c.l.b16 %v25
  %v53 = vpack.c.b16 %v52, %v51
  %v71 = vunpack.c.l.b16 %v26
  %v72 = vunpack.c.l.b16 %v27
  %v73 = vunpack.c.l.b16 %v28
  %v74 = vunpack.c.l.b16 %v29
  %v75 = vunpack.c.l.b16 %v30
  %v76 = vunpack.c.l.b16 %v31
  %v77 = vunpack.c.l.b16 %v32
  %v78 = vunpack.c.l.b16 %v33
  %v79 = vunpack.c.l.b16 %v34
  %v80 = vunpack.c.l.b16 %v35
  %v81 = vunpack.c.l.b16 %v36
  %v82 = vunpack.c.l.b16 %v37
  %v83 = vunpack.c.l.b16 %v38
  %v84 = vunpack.c.l.b16 %v39
  %v85 = vunpack.c.l.b16 %v40
  %v86 = vunpack.c.l.b16 %v41
  %v87 = vpack.c.b16 %v72, %v71
  %v88 = vpack.c.b16 %v74, %v73
  %v89 = vpack.c.b16 %v76, %v75
  %v90 = vpack.c.b16 %v78, %v77
  %v91 = vpack.c.b16 %v80, %v79
  %v92 = vpack.c.b16 %v82, %v81
  %v93 = vpack.c.b16 %v84, %v83
  %v94 = vpack.c.b16 %v86, %v85
  %103 = vmatprep.subr.bf16.mxu0 0
  %104 = vmatpush1.bf16.msra.mxu0 %v87
  %105 = vmatprep.subr.bf16.mxu0 0
  %106 = vmatpush1.bf16.msra.mxu0 %v88
  %107 = vmatprep.subr.bf16.mxu0 0
  %108 = vmatpush1.bf16.msra.mxu0 %v89
  %109 = vmatprep.subr.bf16.mxu0 0
  %110 = vmatpush1.bf16.msra.mxu0 %v90
  %111 = vmatprep.subr.bf16.mxu0 0
  %112 = vmatpush1.bf16.msra.mxu0 %v91
  %113 = vmatprep.subr.bf16.mxu0 0
  %114 = vmatpush1.bf16.msra.mxu0 %v92
  %115 = vmatprep.subr.bf16.mxu0 0
  %116 = vmatpush1.bf16.msra.mxu0 %v93
  %117 = vmatprep.subr.bf16.mxu0 0
  %118 = vmatpush1.bf16.msra.mxu0 %v94
  %119 = vmatprep.subr.bf16.mxu0 0
  %120 = vmatpush1.bf16.msra.mxu0 0
  %121 = vmatprep.subr.bf16.mxu0 0
  %122 = vmatpush1.bf16.msra.mxu0 0
  %123 = vmatprep.subr.bf16.mxu0 0
  %124 = vmatpush1.bf16.msra.mxu0 0
  %125 = vmatprep.subr.bf16.mxu0 0
  %126 = vmatpush1.bf16.msra.mxu0 0
  %127 = vmatprep.subr.bf16.mxu0 0
  %128 = vmatpush1.bf16.msra.mxu0 0
  %129 = vmatprep.subr.bf16.mxu0 0
  %130 = vmatpush1.bf16.msra.mxu0 0
  %131 = vmatprep.subr.bf16.mxu0 0
  %132 = vmatpush1.bf16.msra.mxu0 0
  %133 = vmatprep.subr.bf16.mxu0 0
  %134 = vmatpush1.bf16.msra.mxu0 0
  %135 = vmatprep.mubr.bf16.mxu0 0
  %136 = vmatmul.mubr.bf16.gmra.mrb[0].mxu0 %v53
  %v137 = vpop.f32.mrb[0].mxu0
  %v138 = vadd.f32 %v47, %v137
  %v139 = vpop.f32.mrb[0].mxu0
  %v140 = vpop.f32.mrb[0].mxu0
  %v141 = vadd.f32 %v47, %v140
  %v142 = vpop.f32.mrb[0].mxu0
  %143 = vdwg.mxu0
  %v144 = vld [vmem:[%s3] sm:$0xf]
  %v145 = vld [vmem:[%s3 + $0x4] sm:$0xf]
  %v146 = vunpack.c.l.bf16 %v144
  %v147 = vunpack.c.l.bf16 %v145
  %v148 = vadd.f32 %v138, %v146
  %v149 = vadd.f32 %v141, %v147
  %v150 = vld [vmem:[%s4] sm:$0x1]
  %v151 = vld [vmem:[%s5] sm:$0x1]
  %vm152 = vcmask 261120
  %v153 = vsel %vm152, %v148, 0.0
  %154 = vadd.xlane.f32.xlu0 %v153
  %v155 = vpop.xlane.xlu0 %154
  %v156 = vsel %vm152, %v149, 0.0
  %157 = vadd.xlane.f32.xlu0 %v156
  %v158 = vpop.xlane.xlu0 %157
  %v159 = vrcp.pop 32.0
  %v160 = vmul.f32 %v155, %v159
  %v161 = vmul.f32 %v158, %v159
  %v162 = vsub.f32 %v148, %v160
  %v163 = vsub.f32 %v149, %v161
  %v164 = vmul.f32 %v162, %v162
  %v165 = vmul.f32 %v163, %v163
  %v166 = vsel %vm152, %v164, 0.0
  %167 = vadd.xlane.f32.xlu0 %v166
  %v168 = vpop.xlane.xlu0 %167
  %v169 = vsel %vm152, %v165, 0.0
  %170 = vadd.xlane.f32.xlu0 %v169
  %v171 = vpop.xlane.xlu0 %170
  %v172 = vmul.f32 %v168, %v159
  %v173 = vmul.f32 %v171, %v159
  %v174 = vadd.f32 %v172, 1e-12
  %v175 = vadd.f32 %v173, 1e-12
  %v176 = vrsqrt.pop %v174
  %v177 = vrsqrt.pop %v175
  %v178 = vmul.f32 %v162, %v176
  %v179 = vmul.f32 %v163, %v177
  %v181 = vlaneseq
  %v182 = vshrl.u32 %v181, 7
  %v183 = vsub.s32 0, %v182
  %v184 = vrot.slane %v150, %v183
  %v186 = vmul.f32 %v178, %v184
  %v187 = vmul.f32 %v179, %v184
  %v189 = vlaneseq
  %v190 = vshrl.u32 %v189, 7
  %v191 = vsub.s32 0, %v190
  %v192 = vrot.slane %v151, %v191
  %v194 = vadd.f32 %v186, %v192
  %v195 = vadd.f32 %v187, %v192
  %v196 = vpack.c.bf16 %v195, %v194
  %v198 = vunpack.c.l.b16 %v196
  %v199 = vunpack.c.h.b16 %v196
  %v200 = vpack.c.b16 %v198, %v198
  %v201 = vpack.c.b16 %v199, %v199
  %vm204 = vcmask 257024
  %205 = vst.msk [vmem:[%s6] sm:$0xf] %vm204, %v200
  %206 = vst.msk [vmem:[%s6 + $0x4] sm:$0xf] %vm204, %v201
  // Predicated region
  $region26: #{bert_classifier_forward.17} parent=0 // pred_check
    _
  $region27: #{bert_classifier_forward.17} parent=0 // pred_check_branch
    %208 = sbr.rel (0) target = $region29
  $region28: #{bert_classifier_forward.17} parent=0 // pred_region
    _
  $region29: #{bert_classifier_forward.17} parent=0 // pred_fallthru
    _
  // Predicated region
  $region30: #{bert_classifier_forward.17} parent=0 // pred_check
    _
  $region31: #{bert_classifier_forward.17} parent=0 // pred_check_branch
    %210 = sbr.rel (0) target = $region33
  $region32: #{bert_classifier_forward.17} parent=0 // pred_region
    _
  $region33: #{bert_classifier_forward.17} parent=0 // pred_fallthru
    _

// kernel: bert_classifier_forward.23
$region0: #{bert_classifier_forward.23}
  #allocation0 [shape = 'u32[]', space=smem, size = 0x4, offset = 0x4, fixed_abs, tag = 'smem constant byte address 0x4 - core index']
  #allocation1 [shape = 'u32[144,128]{1,0:T(1,128)}', space=vmem, size = 0x12000, scoped, tag = 'internal scratch']
  %s0 = inlined_call_operand.vmem [shape: bf16[2,32], index: 0, kind: input, shape index: {}]
  %s1 = inlined_call_operand.vmem [shape: bf16[32,16], index: 1, kind: input, shape index: {}]
  %s2 = inlined_call_operand.vmem [shape: f32[1,16], index: 2, kind: input, shape index: {}]
  %s3 = inlined_call_operand.vmem [shape: bf16[16,5], index: 3, kind: input, shape index: {}]
  %s4 = inlined_call_operand.vmem [shape: f32[1,5], index: 4, kind: input, shape index: {}]
  %s5 = inlined_call_operand.hbm [shape: f32[2,5], index: 5, kind: output, shape index: {}]
  %s6 = sld [smem:[#allocation0]]
  $region30: #{bert_classifier_forward.23} parent=0
    _
  %s8 = ssub.s32 1, %s6
  %s9 = scalar_select 0, %s8, %s6
  $region1: #{bert_classifier_forward.23} parent=0
    #allocation2 [shape = 'u8[1024]{0}', space=vmem, size = 0x400, scoped, tag = 'output window, operand 0, single buffered']
    #allocation3 [shape = 's32[1]{0}', space=sflag, size = 0x4, scoped, tag = 'scoped memory for bert_classifier_forward.23']
    %10 = vsyncpa [#allocation3], 0
    // Predicated region
    $region2: #{bert_classifier_forward.23} parent=1 // pred_check
      _
    $region3: #{bert_classifier_forward.23} parent=1 // pred_check_branch
      %12 = sbr.rel (0) target = $region5
    $region4: #{bert_classifier_forward.23} parent=1 // pred_region
      _
    $region5: #{bert_classifier_forward.23} parent=1 // pred_fallthru
      _
    // Predicated region
    $region6: #{bert_classifier_forward.23} parent=1 // pred_check
      _
    $region7: #{bert_classifier_forward.23} parent=1 // pred_check_branch
      %14 = sbr.rel (0) target = $region9
    $region8: #{bert_classifier_forward.23} parent=1 // pred_region
      _
    $region9: #{bert_classifier_forward.23} parent=1 // pred_fallthru
      _
    // Predicated region
    $region10: #{bert_classifier_forward.23} parent=1 // pred_check
      _
    $region11: #{bert_classifier_forward.23} parent=1 // pred_check_branch
      %16 = sbr.rel (0) target = $region13
    $region12: #{bert_classifier_forward.23} parent=1 // pred_region
      _
    $region13: #{bert_classifier_forward.23} parent=1 // pred_fallthru
      _
    // Predicated region
    $region14: #{bert_classifier_forward.23} parent=1 // pred_check
      _
    $region15: #{bert_classifier_forward.23} parent=1 // pred_check_branch
      %18 = sbr.rel (0) target = $region17
    $region16: #{bert_classifier_forward.23} parent=1 // pred_region
      _
    $region17: #{bert_classifier_forward.23} parent=1 // pred_fallthru
      _
    // Predicated region
    $region18: #{bert_classifier_forward.23} parent=1 // pred_check
      _
    $region19: #{bert_classifier_forward.23} parent=1 // pred_check_branch
      %20 = sbr.rel (0) target = $region21
    $region20: #{bert_classifier_forward.23} parent=1 // pred_region
      _
    $region21: #{bert_classifier_forward.23} parent=1 // pred_fallthru
      _
    %v22 = vld [vmem:[%s0] sm:$0x1]
    %v23 = vld [vmem:[%s1] sm:$0xf]
    %v24 = vld [vmem:[%s1 + $0x4] sm:$0xf]
    %v25 = vld [vmem:[%s1 + $0x8] sm:$0xf]
    %v26 = vld [vmem:[%s1 + $0xc] sm:$0xf]
    %v27 = vld [vmem:[%s2] sm:$0x1]
    %v29 = vlaneseq
    %v30 = vshrl.u32 %v29, 7
    %v31 = vsub.s32 0, %v30
    %v32 = vrot.slane %v27, %v31
    %v38 = vunpack.c.l.b16 %v23
    %v39 = vunpack.c.l.b16 %v24
    %v40 = vunpack.c.l.b16 %v25
    %v41 = vunpack.c.l.b16 %v26
    %v42 = vpack.c.b16 %v39, %v38
    %v43 = vpack.c.b16 %v41, %v40
    %vm46 = vcmask 261120
    %v48 = vsel %vm46, %v22, 0
    %50 = vmatprep.subr.bf16.mxu0 0
    %51 = vmatpush1.bf16.msra.mxu0 %v42
    %52 = vmatprep.subr.bf16.mxu0 0
    %53 = vmatpush1.bf16.msra.mxu0 %v43
    %54 = vmatprep.subr.bf16.mxu0 0
    %55 = vmatpush1.bf16.msra.mxu0 0
    %56 = vmatprep.subr.bf16.mxu0 0
    %57 = vmatpush1.bf16.msra.mxu0 0
    %58 = vmatprep.subr.bf16.mxu0 0
    %59 = vmatpush1.bf16.msra.mxu0 0
    %60 = vmatprep.subr.bf16.mxu0 0
    %61 = vmatpush1.bf16.msra.mxu0 0
    %62 = vmatprep.subr.bf16.mxu0 0
    %63 = vmatpush1.bf16.msra.mxu0 0
    %64 = vmatprep.subr.bf16.mxu0 0
    %65 = vmatpush1.bf16.msra.mxu0 0
    %66 = vmatprep.subr.bf16.mxu0 0
    %67 = vmatpush1.bf16.msra.mxu0 0
    %68 = vmatprep.subr.bf16.mxu0 0
    %69 = vmatpush1.bf16.msra.mxu0 0
    %70 = vmatprep.subr.bf16.mxu0 0
    %71 = vmatpush1.bf16.msra.mxu0 0
    %72 = vmatprep.subr.bf16.mxu0 0
    %73 = vmatpush1.bf16.msra.mxu0 0
    %74 = vmatprep.subr.bf16.mxu0 0
    %75 = vmatpush1.bf16.msra.mxu0 0
    %76 = vmatprep.subr.bf16.mxu0 0
    %77 = vmatpush1.bf16.msra.mxu0 0
    %78 = vmatprep.subr.bf16.mxu0 0
    %79 = vmatpush1.bf16.msra.mxu0 0
    %80 = vmatprep.subr.bf16.mxu0 0
    %81 = vmatpush1.bf16.msra.mxu0 0
    %82 = vmatprep.mubr.bf16.mxu0 0
    %83 = vmatmul.mubr.bf16.gmra.mrb[0].mxu0 %v48
    %v84 = vpop.f32.mrb[0].mxu0
    %v85 = vadd.f32 %v32, %v84
    %v86 = vpop.f32.mrb[0].mxu0
    %v87 = vpop.f32.mrb[0].mxu0
    %v88 = vpop.f32.mrb[0].mxu0
    %89 = vdwg.mxu0
    %v90 = vmax.f32 %v85, 0.0
    %v91 = vpack.c.bf16 %v90, %v90
    %v92 = vld [vmem:[%s3] sm:$0xf]
    %v93 = vld [vmem:[%s3 + $0x4] sm:$0xf]
    %v94 = vld [vmem:[%s4] sm:$0x1]
    %v96 = vlaneseq
    %v97 = vshrl.u32 %v96, 7
    %v98 = vsub.s32 0, %v97
    %v99 = vrot.slane %v94, %v98
    %v103 = vunpack.c.l.b16 %v92
    %v104 = vunpack.c.l.b16 %v93
    %v105 = vpack.c.b16 %v104, %v103
    %vm107 = vcmask 130048
    %v109 = vsel %vm107, %v91, 0
    %111 = vmatprep.subr.bf16.mxu0 0
    %112 = vmatpush1.bf16.msra.mxu0 %v105
    %113 = vmatprep.subr.bf16.mxu0 0
    %114 = vmatpush1.bf16.msra.mxu0 0
    %115 = vmatprep.subr.bf16.mxu0 0
    %116 = vmatpush1.bf16.msra.mxu0 0
    %117 = vmatprep.subr.bf16.mxu0 0
    %118 = vmatpush1.bf16.msra.mxu0 0
    %119 = vmatprep.subr.bf16.mxu0 0
    %120 = vmatpush1.bf16.msra.mxu0 0
    %121 = vmatprep.subr.bf16.mxu0 0
    %122 = vmatpush1.bf16.msra.mxu0 0
    %123 = vmatprep.subr.bf16.mxu0 0
    %124 = vmatpush1.bf16.msra.mxu0 0
    %125 = vmatprep.subr.bf16.mxu0 0
    %126 = vmatpush1.bf16.msra.mxu0 0
    %127 = vmatprep.subr.bf16.mxu0 0
    %128 = vmatpush1.bf16.msra.mxu0 0
    %129 = vmatprep.subr.bf16.mxu0 0
    %130 = vmatpush1.bf16.msra.mxu0 0
    %131 = vmatprep.subr.bf16.mxu0 0
    %132 = vmatpush1.bf16.msra.mxu0 0
    %133 = vmatprep.subr.bf16.mxu0 0
    %134 = vmatpush1.bf16.msra.mxu0 0
    %135 = vmatprep.subr.bf16.mxu0 0
    %136 = vmatpush1.bf16.msra.mxu0 0
    %137 = vmatprep.subr.bf16.mxu0 0
    %138 = vmatpush1.bf16.msra.mxu0 0
    %139 = vmatprep.subr.bf16.mxu0 0
    %140 = vmatpush1.bf16.msra.mxu0 0
    %141 = vmatprep.subr.bf16.mxu0 0
    %142 = vmatpush1.bf16.msra.mxu0 0
    %143 = vmatprep.mubr.bf16.mxu0 0
    %144 = vmatmul.mubr.bf16.gmra.mrb[0].mxu0 %v109
    %v145 = vpop.f32.mrb[0].mxu0
    %v146 = vadd.f32 %v99, %v145
    %v147 = vpop.f32.mrb[0].mxu0
    %v148 = vpop.f32.mrb[0].mxu0
    %v149 = vpop.f32.mrb[0].mxu0
    %150 = vdwg.mxu0
    %vm151 = vcmask 33792
    %152 = vst.msk [vmem:[#allocation2] sm:$0x3] %vm151, %v146
    // Predicated region
    $region22: #{bert_classifier_forward.23} parent=1 // pred_check
      _
    $region23: #{bert_classifier_forward.23} parent=1 // pred_check_branch
      %154 = sbr.rel (0) target = $region25
    $region24: #{bert_classifier_forward.23} parent=1 // pred_region
      %s156 = ssub.s32 32, 32
      %157 = vsyncadd [#allocation3], %s156
      %s159 = sshll.u32 [#allocation2], 4
      %s160 = int_to_ptr.vmem [resolvable:$true] %s159
      %162 = dma.vmem_to_hbm [thread:$0]  %s160, 32, %s5, [#allocation3]
    $region25: #{bert_classifier_forward.23} parent=1 // pred_fallthru
      _
    // Predicated region
    $region26: #{bert_classifier_forward.23} parent=1 // pred_check
      _
    $region27: #{bert_classifier_forward.23} parent=1 // pred_check_branch
      %164 = sbr.rel (0) target = $region29
    $region28: #{bert_classifier_forward.23} parent=1 // pred_region
      %165 = dma.done [#allocation3], 32
    $region29: #{bert_classifier_forward.23} parent=1 // pred_fallthru
      _
    %166 = vsyncpa [#allocation3], 1

</llo_original>
